<compile_context>
chip_gen: v7x
topology: tpu7x:2x2x1
jax: 0.10.0
libtpu: 0.0.40
codegen_flags: <defaults>
</compile_context>

<pallas_src>
import numpy as np
import jax
import jax.numpy as jnp
from jax.experimental import pallas as pl
from jax.experimental.pallas import tpu as pltpu

BN_EPS = 1e-5
LEAKY_SLOPE = 0.2


def _vmem_limit_bytes():
    """Per-generation VMEM budget (leave ~25% headroom below physical VMEM)."""
    try:
        cap = int(pltpu.get_tpu_info().vmem_capacity_bytes)
    except Exception:
        cap = 64 << 20                      # conservative default (v7x per-core VMEM)
    return min((cap * 3) // 4, 96 << 20)


# ----------------------------------------------------------------------------
# Fused  norm -> relu -> pad -> conv(+bias)  kernel (one grid step per image).
# ----------------------------------------------------------------------------
def _make_block_kernel(*, kh, kw, stride, pad, h, w, ho, wo, cin, cout,
                       relu_type, norm_mode):
    # norm_mode: "none"     -> BN already folded into the weights (or no norm)
    #            "affine"   -> x*scale + offset with per-channel scale/offset refs
    #            "instance" -> InstanceNorm stats computed in-kernel
    def kernel(*refs):
        if norm_mode == "affine":
            x_ref, w_ref, b_ref, sc_ref, of_ref, o_ref, xact_ref = refs
        else:
            x_ref, w_ref, b_ref, o_ref, xact_ref = refs
            sc_ref = of_ref = None

        # x_ref : [1, Cin, H, W]    raw NCHW image (f32)
        # w_ref : [KH*KW, Cout, Cin] conv taps (bf16, BN scale possibly folded)
        # b_ref : [Cout, 1]          conv bias (f32)
        # o_ref : [1, Cout, Ho*Wo]   output block (lane-dense last dim)
        x = x_ref[0].astype(jnp.float32)                     # [Cin, H, W]

        # ---- normalisation (applied BEFORE zero padding, like PyTorch) -----
        if norm_mode == "affine":
            x = (x * sc_ref[...].reshape(cin, 1, 1)
                 + of_ref[...].reshape(cin, 1, 1))
        elif norm_mode == "instance":
            x2 = x.reshape(cin, h * w)
            mu = jnp.mean(x2, axis=1, keepdims=True)                      # [Cin,1]
            var = jnp.mean(jnp.square(x2 - mu), axis=1, keepdims=True)    # biased
            inv = jax.lax.rsqrt(var + BN_EPS)
            x = (x - mu.reshape(cin, 1, 1)) * inv.reshape(cin, 1, 1)

        # ---- activation ------------------------------------------------------
        if relu_type == "leaky":
            x = jnp.where(x >= 0.0, x, LEAKY_SLOPE * x)      # LeakyReLU(0.2)
        else:
            x = jnp.maximum(x, 0.0)                          # ReLU

        # ---- zero padding into the VMEM scratch (relu(0) == 0, so this
        #      matches PyTorch's pad-inside-conv ordering) ---------------------
        if pad:
            xact_ref[...] = jnp.zeros_like(xact_ref)
            xact_ref[:, pad:pad + h, pad:pad + w] = x
        else:
            xact_ref[...] = x

        # ---- conv as KH*KW accumulating MXU matmuls, bias-initialised acc ----
        acc = jnp.broadcast_to(b_ref[...], (cout, ho * wo)).astype(jnp.float32)
        for ki in range(kh):
            for kj in range(kw):
                if stride == 1:
                    patch = xact_ref[:, ki:ki + ho, kj:kj + wo]
                else:
                    patch = xact_ref[:, pl.ds(ki, ho, stride),
                                     pl.ds(kj, wo, stride)]
                patch = patch.reshape(cin, ho * wo).astype(jnp.bfloat16)
                acc = acc + jnp.dot(w_ref[ki * kw + kj], patch,
                                    preferred_element_type=jnp.float32)

        o_ref[0] = acc.astype(o_ref.dtype)

    return kernel


# ----------------------------------------------------------------------------
# ResUNet_block forward (NCHW in / NCHW out, like the PyTorch module).
# ----------------------------------------------------------------------------
def resunet_block_forward(params, x_nchw, *, kernel_size, stride, padding,
                          relu_type, norm_type="BatchNorm"):
    assert relu_type in ("normal", "leaky")
    w = params["w"]                                     # [KH, KW, Cin, Cout] (HWIO)
    b = params["b"]                                     # [Cout]
    KH, KW, Cin, Cout = w.shape
    assert KH == KW == kernel_size

    N, C, H, W = x_nchw.shape
    assert C == Cin

    p = padding
    Hp, Wp = H + 2 * p, W + 2 * p
    Ho = (Hp - KH) // stride + 1
    Wo = (Wp - KW) // stride + 1

    # --- decide how the norm is realised (eval semantics) -------------------
    norm_mode = "none"
    scale = offset = None
    if norm_type == "BatchNorm":
        mean = np.asarray(params["running_mean"], np.float32)
        var = np.asarray(params["running_var"], np.float32)
        s = 1.0 / np.sqrt(var + BN_EPS)
        o = -mean * s
        if np.all(o == 0.0) and np.all(s > 0.0):
            # relu(s*x) == s*relu(x) for s > 0  =>  fold the BN scale into the
            # conv weights; the kernel then runs a pure relu->conv.
            w = w * jnp.asarray(s)[None, None, :, None]
        else:
            norm_mode = "affine"
            scale = jnp.asarray(s, jnp.float32).reshape(Cin, 1)
            offset = jnp.asarray(o, jnp.float32).reshape(Cin, 1)
    elif norm_type == "InstanceNorm":
        norm_mode = "instance"
    else:
        raise ValueError(f"unsupported norm_type: {norm_type}")

    # taps reordered to [KH*KW, Cout, Cin] so each tap matmul is
    # [Cout, Cin] @ [Cin, Ho*Wo] -> lane-dense [Cout, Ho*Wo] accumulator.
    w_taps = jnp.transpose(w, (0, 1, 3, 2)).reshape(KH * KW, Cout, Cin)
    w_taps = w_taps.astype(jnp.bfloat16)
    bias = b.reshape(Cout, 1).astype(jnp.float32)

    inputs = [x_nchw.astype(jnp.float32), w_taps, bias]
    in_specs = [
        pl.BlockSpec((1, Cin, H, W), lambda n: (n, 0, 0, 0)),
        # weights/bias: constant block index -> DMA'd once, stay resident.
        pl.BlockSpec((KH * KW, Cout, Cin), lambda n: (0, 0, 0)),
        pl.BlockSpec((Cout, 1), lambda n: (0, 0)),
    ]
    if norm_mode == "affine":
        inputs += [scale, offset]
        in_specs += [pl.BlockSpec((Cin, 1), lambda n: (0, 0)),
                     pl.BlockSpec((Cin, 1), lambda n: (0, 0))]

    kernel = _make_block_kernel(kh=KH, kw=KW, stride=stride, pad=p, h=H, w=W,
                                ho=Ho, wo=Wo, cin=Cin, cout=Cout,
                                relu_type=relu_type, norm_mode=norm_mode)

    out = pl.pallas_call(
        kernel,
        out_shape=jax.ShapeDtypeStruct((N, Cout, Ho * Wo), jnp.float32),
        grid_spec=pltpu.PrefetchScalarGridSpec(
            num_scalar_prefetch=0,
            grid=(N,),
            in_specs=in_specs,
            out_specs=pl.BlockSpec((1, Cout, Ho * Wo), lambda n: (n, 0, 0)),
            scratch_shapes=[
                pltpu.VMEM((Cin, Hp, Wp), jnp.float32),   # activated + padded tile
            ],
        ),
        compiler_params=pltpu.CompilerParams(
            dimension_semantics=("parallel",),            # >=2 steps: both v7x TCs
            vmem_limit_bytes=_vmem_limit_bytes(),
        ),
    )(*inputs)

    # (N, Cout, Ho*Wo) -> (N, Cout, Ho, Wo): contiguous reshape, no transpose.
    return out.reshape(N, Cout, Ho, Wo)


# ----------------------------------------------------------------------------
# Pure-JAX reference (PyTorch eval semantics) for correctness checking.
# ----------------------------------------------------------------------------
def resunet_block_reference(params, x_nchw, *, kernel_size, stride, padding,
                            relu_type, norm_type="BatchNorm"):
    w, b = params["w"], params["b"]
    x = x_nchw
    if norm_type == "BatchNorm":
        mean = jnp.asarray(params["running_mean"])[None, :, None, None]
        var = jnp.asarray(params["running_var"])[None, :, None, None]
        x = (x - mean) / jnp.sqrt(var + BN_EPS)
    elif norm_type == "InstanceNorm":
        mu = jnp.mean(x, axis=(2, 3), keepdims=True)
        var = jnp.var(x, axis=(2, 3), keepdims=True)
        x = (x - mu) / jnp.sqrt(var + BN_EPS)
    if relu_type == "leaky":
        x = jnp.where(x >= 0.0, x, LEAKY_SLOPE * x)
    else:
        x = jnp.maximum(x, 0.0)
    y = jax.lax.conv_general_dilated(
        x, w, window_strides=(stride, stride),
        padding=((padding, padding), (padding, padding)),
        dimension_numbers=("NCHW", "HWIO", "NCHW"))
    return y + b[None, :, None, None]


def init_block_params(key, in_channels, out_channels, kernel_size):
    kw_key, kb_key = jax.random.split(key)
    fan_in = in_channels * kernel_size * kernel_size
    w = jax.random.normal(
        kw_key, (kernel_size, kernel_size, in_channels, out_channels),
        jnp.float32) / np.sqrt(fan_in)
    b = 0.01 * jax.random.normal(kb_key, (out_channels,), jnp.float32)
    return {"w": w, "b": b,
            "running_mean": np.zeros((in_channels,), np.float32),  # fresh BatchNorm2d stats
            "running_var": np.ones((in_channels,), np.float32)}


if __name__ == "__main__":
    key = jax.random.PRNGKey(0)
    kx, kp1, kp2 = jax.random.split(key, 3)

    N, Cin, H, W = 2, 4, 16, 16
    Cout = 32
    x = jax.random.normal(kx, (N, Cin, H, W), jnp.float32)   # NCHW, like the PyTorch module

    # Config 1: canonical ResUNet_block (3x3, stride 1, pad 1, LeakyReLU, BatchNorm).
    params1 = init_block_params(kp1, Cin, Cout, 3)
    y1 = jax.block_until_ready(
        resunet_block_forward(params1, x, kernel_size=3, stride=1, padding=1,
                              relu_type="leaky", norm_type="BatchNorm"))
    r1 = resunet_block_reference(params1, x, kernel_size=3, stride=1, padding=1,
                                 relu_type="leaky", norm_type="BatchNorm")
    assert y1.shape == (N, Cout, H, W), y1.shape
    assert bool(jnp.all(jnp.isfinite(y1)))
    np.testing.assert_allclose(np.asarray(y1), np.asarray(r1), rtol=5e-2, atol=5e-2)

    # Config 2: ReLU + InstanceNorm variant of the same block.
    params2 = init_block_params(kp2, Cin, Cout, 3)
    y2 = jax.block_until_ready(
        resunet_block_forward(params2, x, kernel_size=3, stride=1, padding=1,
                              relu_type="normal", norm_type="InstanceNorm"))
    r2 = resunet_block_reference(params2, x, kernel_size=3, stride=1, padding=1,
                                 relu_type="normal", norm_type="InstanceNorm")
    np.testing.assert_allclose(np.asarray(y2), np.asarray(r2), rtol=5e-2, atol=5e-2)

    print("KERNEL_OK")
</pallas_src>

<mosaic_0001>
module attributes {stable_mosaic.version = 11 : i64} {
  func.func @kernel(%arg0: i32, %arg1: memref<1x4x16x16xf32, #tpu.memory_space<vmem>>, %arg2: memref<9x32x4xbf16, #tpu.memory_space<vmem>>, %arg3: memref<32x1xf32, #tpu.memory_space<vmem>>, %arg4: memref<1x32x256xf32, #tpu.memory_space<vmem>>, %arg5: memref<4x18x18xf32, #tpu.memory_space<vmem>>) attributes {dimension_semantics = [#tpu.dimension_semantics<parallel>], iteration_bounds = array<i64: 2>, scalar_prefetch = 0 : i64, scratch_operands = 1 : i64, tpu.core_type = #tpu.core_type<tc>, window_params = [{transform_indices = @transform_0, window_bounds = array<i64: 1, 4, 16, 16>}, {pipeline_mode = #tpu.pipeline_mode<synchronous>, transform_indices = @transform_1, window_bounds = array<i64: 9, 32, 4>}, {pipeline_mode = #tpu.pipeline_mode<synchronous>, transform_indices = @transform_2, window_bounds = array<i64: 32, 1>}, {transform_indices = @transform_3, window_bounds = array<i64: 1, 32, 256>}]} {
    %c0 = arith.constant 0 : index
    %c0_0 = arith.constant 0 : index
    %c0_1 = arith.constant 0 : index
    %c0_2 = arith.constant 0 : index
    %0 = vector.load %arg1[%c0, %c0_0, %c0_1, %c0_2] : memref<1x4x16x16xf32, #tpu.memory_space<vmem>>, vector<1x4x16x16xf32>
    %1 = vector.shape_cast %0 : vector<1x4x16x16xf32> to vector<4x16x16xf32>
    %cst = arith.constant 0.000000e+00 : f32
    %2 = vector.broadcast %cst : f32 to vector<4x16x16xf32>
    %3 = arith.cmpf oge, %1, %2 : vector<4x16x16xf32>
    %cst_3 = arith.constant 2.000000e-01 : f32
    %4 = vector.broadcast %cst_3 : f32 to vector<4x16x16xf32>
    %5 = arith.mulf %4, %1 : vector<4x16x16xf32>
    %6 = arith.select %3, %1, %5 : vector<4x16x16xi1>, vector<4x16x16xf32>
    %cst_4 = arith.constant 0.000000e+00 : f32
    %7 = vector.broadcast %cst_4 : f32 to vector<4x18x18xf32>
    %c0_5 = arith.constant 0 : index
    %c0_6 = arith.constant 0 : index
    %c0_7 = arith.constant 0 : index
    %8 = vector.load %arg5[%c0_5, %c0_6, %c0_7] : memref<4x18x18xf32, #tpu.memory_space<vmem>>, vector<4x18x18xf32>
    tpu.vector_store %arg5[%c0_5, %c0_6, %c0_7], %7 {strides = array<i32>} : memref<4x18x18xf32, #tpu.memory_space<vmem>>, vector<4x18x18xf32>,
    %c0_8 = arith.constant 0 : index
    %c1 = arith.constant 1 : index
    %c1_9 = arith.constant 1 : index
    %9 = vector.load %arg5[%c0_8, %c1, %c1_9] : memref<4x18x18xf32, #tpu.memory_space<vmem>>, vector<4x16x16xf32>
    tpu.vector_store %arg5[%c0_8, %c1, %c1_9], %6 {strides = array<i32>} : memref<4x18x18xf32, #tpu.memory_space<vmem>>, vector<4x16x16xf32>,
    %c0_10 = arith.constant 0 : index
    %c0_11 = arith.constant 0 : index
    %10 = vector.load %arg3[%c0_10, %c0_11] : memref<32x1xf32, #tpu.memory_space<vmem>>, vector<32x1xf32>
    %11 = vector.shape_cast %10 : vector<32x1xf32> to vector<32x1xf32>
    %12 = vector.broadcast %11 : vector<32x1xf32> to vector<32x256xf32>
    %c0_12 = arith.constant 0 : index
    %c0_13 = arith.constant 0 : index
    %c0_14 = arith.constant 0 : index
    %13 = vector.load %arg5[%c0_12, %c0_13, %c0_14] : memref<4x18x18xf32, #tpu.memory_space<vmem>>, vector<4x16x16xf32>
    %14 = vector.shape_cast %13 : vector<4x16x16xf32> to vector<4x256xf32>
    %15 = arith.truncf %14 : vector<4x256xf32> to vector<4x256xbf16>
    %c0_15 = arith.constant 0 : index
    %c0_16 = arith.constant 0 : index
    %c0_17 = arith.constant 0 : index
    %16 = vector.load %arg2[%c0_15, %c0_16, %c0_17] : memref<9x32x4xbf16, #tpu.memory_space<vmem>>, vector<1x32x4xbf16>
    %17 = vector.shape_cast %16 : vector<1x32x4xbf16> to vector<32x4xbf16>
    %cst_18 = arith.constant dense<0.000000e+00> : vector<32x256xf32>
    %18 = tpu.matmul %17, %15, %cst_18 {dimension_numbers = #tpu.dot_dimension_numbers<[1], [0], [0], [1], [0, 0, 1, 1], [], []>} : vector<32x4xbf16>, vector<4x256xbf16>, vector<32x256xf32> -> vector<32x256xf32>
    %19 = arith.addf %12, %18 : vector<32x256xf32>
    %c0_19 = arith.constant 0 : index
    %c0_20 = arith.constant 0 : index
    %c1_21 = arith.constant 1 : index
    %20 = vector.load %arg5[%c0_19, %c0_20, %c1_21] : memref<4x18x18xf32, #tpu.memory_space<vmem>>, vector<4x16x16xf32>
    %21 = vector.shape_cast %20 : vector<4x16x16xf32> to vector<4x256xf32>
    %22 = arith.truncf %21 : vector<4x256xf32> to vector<4x256xbf16>
    %c1_22 = arith.constant 1 : index
    %c0_23 = arith.constant 0 : index
    %c0_24 = arith.constant 0 : index
    %23 = vector.load %arg2[%c1_22, %c0_23, %c0_24] : memref<9x32x4xbf16, #tpu.memory_space<vmem>>, vector<1x32x4xbf16>
    %24 = vector.shape_cast %23 : vector<1x32x4xbf16> to vector<32x4xbf16>
    %cst_25 = arith.constant dense<0.000000e+00> : vector<32x256xf32>
    %25 = tpu.matmul %24, %22, %cst_25 {dimension_numbers = #tpu.dot_dimension_numbers<[1], [0], [0], [1], [0, 0, 1, 1], [], []>} : vector<32x4xbf16>, vector<4x256xbf16>, vector<32x256xf32> -> vector<32x256xf32>
    %26 = arith.addf %19, %25 : vector<32x256xf32>
    %c0_26 = arith.constant 0 : index
    %c0_27 = arith.constant 0 : index
    %c2 = arith.constant 2 : index
    %27 = vector.load %arg5[%c0_26, %c0_27, %c2] : memref<4x18x18xf32, #tpu.memory_space<vmem>>, vector<4x16x16xf32>
    %28 = vector.shape_cast %27 : vector<4x16x16xf32> to vector<4x256xf32>
    %29 = arith.truncf %28 : vector<4x256xf32> to vector<4x256xbf16>
    %c2_28 = arith.constant 2 : index
    %c0_29 = arith.constant 0 : index
    %c0_30 = arith.constant 0 : index
    %30 = vector.load %arg2[%c2_28, %c0_29, %c0_30] : memref<9x32x4xbf16, #tpu.memory_space<vmem>>, vector<1x32x4xbf16>
    %31 = vector.shape_cast %30 : vector<1x32x4xbf16> to vector<32x4xbf16>
    %cst_31 = arith.constant dense<0.000000e+00> : vector<32x256xf32>
    %32 = tpu.matmul %31, %29, %cst_31 {dimension_numbers = #tpu.dot_dimension_numbers<[1], [0], [0], [1], [0, 0, 1, 1], [], []>} : vector<32x4xbf16>, vector<4x256xbf16>, vector<32x256xf32> -> vector<32x256xf32>
    %33 = arith.addf %26, %32 : vector<32x256xf32>
    %c0_32 = arith.constant 0 : index
    %c1_33 = arith.constant 1 : index
    %c0_34 = arith.constant 0 : index
    %34 = vector.load %arg5[%c0_32, %c1_33, %c0_34] : memref<4x18x18xf32, #tpu.memory_space<vmem>>, vector<4x16x16xf32>
    %35 = vector.shape_cast %34 : vector<4x16x16xf32> to vector<4x256xf32>
    %36 = arith.truncf %35 : vector<4x256xf32> to vector<4x256xbf16>
    %c3 = arith.constant 3 : index
    %c0_35 = arith.constant 0 : index
    %c0_36 = arith.constant 0 : index
    %37 = vector.load %arg2[%c3, %c0_35, %c0_36] : memref<9x32x4xbf16, #tpu.memory_space<vmem>>, vector<1x32x4xbf16>
    %38 = vector.shape_cast %37 : vector<1x32x4xbf16> to vector<32x4xbf16>
    %cst_37 = arith.constant dense<0.000000e+00> : vector<32x256xf32>
    %39 = tpu.matmul %38, %36, %cst_37 {dimension_numbers = #tpu.dot_dimension_numbers<[1], [0], [0], [1], [0, 0, 1, 1], [], []>} : vector<32x4xbf16>, vector<4x256xbf16>, vector<32x256xf32> -> vector<32x256xf32>
    %40 = arith.addf %33, %39 : vector<32x256xf32>
    %c0_38 = arith.constant 0 : index
    %c1_39 = arith.constant 1 : index
    %c1_40 = arith.constant 1 : index
    %41 = vector.load %arg5[%c0_38, %c1_39, %c1_40] : memref<4x18x18xf32, #tpu.memory_space<vmem>>, vector<4x16x16xf32>
    %42 = vector.shape_cast %41 : vector<4x16x16xf32> to vector<4x256xf32>
    %43 = arith.truncf %42 : vector<4x256xf32> to vector<4x256xbf16>
    %c4 = arith.constant 4 : index
    %c0_41 = arith.constant 0 : index
    %c0_42 = arith.constant 0 : index
    %44 = vector.load %arg2[%c4, %c0_41, %c0_42] : memref<9x32x4xbf16, #tpu.memory_space<vmem>>, vector<1x32x4xbf16>
    %45 = vector.shape_cast %44 : vector<1x32x4xbf16> to vector<32x4xbf16>
    %cst_43 = arith.constant dense<0.000000e+00> : vector<32x256xf32>
    %46 = tpu.matmul %45, %43, %cst_43 {dimension_numbers = #tpu.dot_dimension_numbers<[1], [0], [0], [1], [0, 0, 1, 1], [], []>} : vector<32x4xbf16>, vector<4x256xbf16>, vector<32x256xf32> -> vector<32x256xf32>
    %47 = arith.addf %40, %46 : vector<32x256xf32>
    %c0_44 = arith.constant 0 : index
    %c1_45 = arith.constant 1 : index
    %c2_46 = arith.constant 2 : index
    %48 = vector.load %arg5[%c0_44, %c1_45, %c2_46] : memref<4x18x18xf32, #tpu.memory_space<vmem>>, vector<4x16x16xf32>
    %49 = vector.shape_cast %48 : vector<4x16x16xf32> to vector<4x256xf32>
    %50 = arith.truncf %49 : vector<4x256xf32> to vector<4x256xbf16>
    %c5 = arith.constant 5 : index
    %c0_47 = arith.constant 0 : index
    %c0_48 = arith.constant 0 : index
    %51 = vector.load %arg2[%c5, %c0_47, %c0_48] : memref<9x32x4xbf16, #tpu.memory_space<vmem>>, vector<1x32x4xbf16>
    %52 = vector.shape_cast %51 : vector<1x32x4xbf16> to vector<32x4xbf16>
    %cst_49 = arith.constant dense<0.000000e+00> : vector<32x256xf32>
    %53 = tpu.matmul %52, %50, %cst_49 {dimension_numbers = #tpu.dot_dimension_numbers<[1], [0], [0], [1], [0, 0, 1, 1], [], []>} : vector<32x4xbf16>, vector<4x256xbf16>, vector<32x256xf32> -> vector<32x256xf32>
    %54 = arith.addf %47, %53 : vector<32x256xf32>
    %c0_50 = arith.constant 0 : index
    %c2_51 = arith.constant 2 : index
    %c0_52 = arith.constant 0 : index
    %55 = vector.load %arg5[%c0_50, %c2_51, %c0_52] : memref<4x18x18xf32, #tpu.memory_space<vmem>>, vector<4x16x16xf32>
    %56 = vector.shape_cast %55 : vector<4x16x16xf32> to vector<4x256xf32>
    %57 = arith.truncf %56 : vector<4x256xf32> to vector<4x256xbf16>
    %c6 = arith.constant 6 : index
    %c0_53 = arith.constant 0 : index
    %c0_54 = arith.constant 0 : index
    %58 = vector.load %arg2[%c6, %c0_53, %c0_54] : memref<9x32x4xbf16, #tpu.memory_space<vmem>>, vector<1x32x4xbf16>
    %59 = vector.shape_cast %58 : vector<1x32x4xbf16> to vector<32x4xbf16>
    %cst_55 = arith.constant dense<0.000000e+00> : vector<32x256xf32>
    %60 = tpu.matmul %59, %57, %cst_55 {dimension_numbers = #tpu.dot_dimension_numbers<[1], [0], [0], [1], [0, 0, 1, 1], [], []>} : vector<32x4xbf16>, vector<4x256xbf16>, vector<32x256xf32> -> vector<32x256xf32>
    %61 = arith.addf %54, %60 : vector<32x256xf32>
    %c0_56 = arith.constant 0 : index
    %c2_57 = arith.constant 2 : index
    %c1_58 = arith.constant 1 : index
    %62 = vector.load %arg5[%c0_56, %c2_57, %c1_58] : memref<4x18x18xf32, #tpu.memory_space<vmem>>, vector<4x16x16xf32>
    %63 = vector.shape_cast %62 : vector<4x16x16xf32> to vector<4x256xf32>
    %64 = arith.truncf %63 : vector<4x256xf32> to vector<4x256xbf16>
    %c7 = arith.constant 7 : index
    %c0_59 = arith.constant 0 : index
    %c0_60 = arith.constant 0 : index
    %65 = vector.load %arg2[%c7, %c0_59, %c0_60] : memref<9x32x4xbf16, #tpu.memory_space<vmem>>, vector<1x32x4xbf16>
    %66 = vector.shape_cast %65 : vector<1x32x4xbf16> to vector<32x4xbf16>
    %cst_61 = arith.constant dense<0.000000e+00> : vector<32x256xf32>
    %67 = tpu.matmul %66, %64, %cst_61 {dimension_numbers = #tpu.dot_dimension_numbers<[1], [0], [0], [1], [0, 0, 1, 1], [], []>} : vector<32x4xbf16>, vector<4x256xbf16>, vector<32x256xf32> -> vector<32x256xf32>
    %68 = arith.addf %61, %67 : vector<32x256xf32>
    %c0_62 = arith.constant 0 : index
    %c2_63 = arith.constant 2 : index
    %c2_64 = arith.constant 2 : index
    %69 = vector.load %arg5[%c0_62, %c2_63, %c2_64] : memref<4x18x18xf32, #tpu.memory_space<vmem>>, vector<4x16x16xf32>
    %70 = vector.shape_cast %69 : vector<4x16x16xf32> to vector<4x256xf32>
    %71 = arith.truncf %70 : vector<4x256xf32> to vector<4x256xbf16>
    %c8 = arith.constant 8 : index
    %c0_65 = arith.constant 0 : index
    %c0_66 = arith.constant 0 : index
    %72 = vector.load %arg2[%c8, %c0_65, %c0_66] : memref<9x32x4xbf16, #tpu.memory_space<vmem>>, vector<1x32x4xbf16>
    %73 = vector.shape_cast %72 : vector<1x32x4xbf16> to vector<32x4xbf16>
    %cst_67 = arith.constant dense<0.000000e+00> : vector<32x256xf32>
    %74 = tpu.matmul %73, %71, %cst_67 {dimension_numbers = #tpu.dot_dimension_numbers<[1], [0], [0], [1], [0, 0, 1, 1], [], []>} : vector<32x4xbf16>, vector<4x256xbf16>, vector<32x256xf32> -> vector<32x256xf32>
    %75 = arith.addf %68, %74 : vector<32x256xf32>
    %c0_68 = arith.constant 0 : index
    %c0_69 = arith.constant 0 : index
    %c0_70 = arith.constant 0 : index
    %76 = vector.load %arg4[%c0_68, %c0_69, %c0_70] : memref<1x32x256xf32, #tpu.memory_space<vmem>>, vector<1x32x256xf32>
    %77 = vector.shape_cast %76 : vector<1x32x256xf32> to vector<32x256xf32>
    %78 = vector.shape_cast %75 : vector<32x256xf32> to vector<1x32x256xf32>
    tpu.vector_store %arg4[%c0_68, %c0_69, %c0_70], %78 {strides = array<i32>} : memref<1x32x256xf32, #tpu.memory_space<vmem>>, vector<1x32x256xf32>,
    return
  }
  func.func @transform_0(%arg0: i32) -> (i32, i32, i32, i32) {
    %c0_i32 = arith.constant 0 : i32
    %c0_i32_0 = arith.constant 0 : i32
    %c0_i32_1 = arith.constant 0 : i32
    %c0_i32_2 = arith.constant 0 : i32
    return %arg0, %c0_i32, %c0_i32_0, %c0_i32_1 : i32, i32, i32, i32
  }
  func.func @transform_1(%arg0: i32) -> (i32, i32, i32) {
    %c0_i32 = arith.constant 0 : i32
    %c0_i32_0 = arith.constant 0 : i32
    %c0_i32_1 = arith.constant 0 : i32
    %c0_i32_2 = arith.constant 0 : i32
    return %c0_i32, %c0_i32_0, %c0_i32_1 : i32, i32, i32
  }
  func.func @transform_2(%arg0: i32) -> (i32, i32) {
    %c0_i32 = arith.constant 0 : i32
    %c0_i32_0 = arith.constant 0 : i32
    %c0_i32_1 = arith.constant 0 : i32
    return %c0_i32, %c0_i32_0 : i32, i32
  }
  func.func @transform_3(%arg0: i32) -> (i32, i32, i32) {
    %c0_i32 = arith.constant 0 : i32
    %c0_i32_0 = arith.constant 0 : i32
    %c0_i32_1 = arith.constant 0 : i32
    return %arg0, %c0_i32, %c0_i32_0 : i32, i32, i32
  }
}

</mosaic_0001>

<llo_original>
// kernel: tpu_custom_call.1
$region0: #{tpu_custom_call.1}
  #allocation0 [shape = 'u32[]', space=smem, size = 0x4, offset = 0x4, fixed_abs, tag = 'smem constant byte address 0x4 - core index']
  #allocation1 [shape = 'u32[144,128]{1,0:T(1,128)}', space=vmem, size = 0x12000, scoped, tag = 'internal scratch']
  #allocation2 [shape = 'f32[4,18,18]{2,1,0:T(8,128)}', space=vmem, size = 0xc000, scoped, tag = 'scratch operand']
  %s0 = inlined_call_operand.vmem [shape: f32[2,4,16,16], index: 0, kind: input, shape index: {}]
  %s1 = inlined_call_operand.vmem [shape: bf16[9,32,4], index: 1, kind: input, shape index: {}]
  %s2 = inlined_call_operand.vmem [shape: f32[32,1], index: 2, kind: input, shape index: {}]
  %s3 = inlined_call_operand.hbm [shape: f32[2,32,256], index: 3, kind: output, shape index: {}]
  %s4 = sld [smem:[#allocation0]]
  $region45: #{tpu_custom_call.1} parent=0
    _
  %s6 = ssub.s32 1, %s4
  %s7 = scalar_select 0, %s6, %s4
  $region1: #{tpu_custom_call.1} parent=0
    #allocation3 [shape = 'u8[65536]{0}', space=vmem, size = 0x10000, scoped, tag = 'output window, operand 0']
    #allocation4 [shape = 's32[2]{0}', space=sflag, size = 0x8, scoped, tag = 'scoped memory for tpu_custom_call.1']
    %8 = vsyncpa [#allocation4], 0
    %s9 = scalar_lea.sflag [#allocation4], 1
    %10 = vsyncpa %s9, 0
    loop: start=0, step=1, limit=4
    $region2: #{tpu_custom_call.1} parent=1 // loop_pre_header
      _
    $region3: #{tpu_custom_call.1} parent=1 // loop_header
      %s12 = sphi 0, %s16
      %p13 = scmp.ge.s32.totalorder %s12, 4
      %s22 = sphi 0, %s24
      %s25 = sphi 0, %s22
      %s26 = sphi 0, %s25
      %s42 = sphi 0, %s26
      %s46 = sphi 0, %s46
      %s48 = sphi 0, %s46
      %s49 = sphi 0, %s48
      %s63 = sphi 0, %s49
      %s67 = sphi 0, %s67
      %s69 = sphi 0, %s67
      %s70 = sphi 0, %s69
      %s84 = sphi 0, %s70
      %s90 = sphi 0, %s92
      %s93 = sphi 0, %s90
      %s94 = sphi 0, %s93
      %s110 = sphi 0, %s94
    $region4: #{tpu_custom_call.1} parent=1 // loop_header_branch
      %15 = sbr.rel (%p13) target = $region8
    $region5: #{tpu_custom_call.1} parent=1 // loop_body
      %s17 = ssub.s32 %s12, 1
      %s18 = ssub.s32 %s12, 2
      %s19 = sadd.s32 %s12, 1
      %s20 = ssub.s32 %s12, %s19
      %p21 = scmp.eq.s32.totalorder %s20, 0
      %s23 = sadd.s32 %s22, 1
      %s24 = scalar_select %p21, %s22, %s23
      %p27 = pneg %p21
      %p28 = scmp.eq.s32.totalorder %s12, 1
      %p29 = por %p27, %p28
      %p30 = scmp.ne.s32.totalorder %s22, %s25
      %p31 = scmp.eq.s32.totalorder %s12, 0
      %p32 = por %p30, %p31
      %p33 = scmp.ne.s32.totalorder %s22, %s25
      %p34 = scmp.eq.s32.totalorder %s17, 1
      %p35 = por %p33, %p34
      %p36 = scmp.ne.s32.totalorder %s25, %s26
      %p37 = scmp.eq.s32.totalorder %s17, 0
      %p38 = por %p36, %p37
      %p39 = scmp.ne.s32.totalorder %s25, %s26
      %p40 = scmp.eq.s32.totalorder %s18, 1
      %p41 = por %p39, %p40
      %p43 = scmp.ne.s32.totalorder %s26, %s42
      %p44 = scmp.eq.s32.totalorder %s18, 0
      %p45 = por %p43, %p44
      %s47 = sadd.s32 %s46, 1
      %p50 = scmp.eq.s32.totalorder %s12, 1
      %p51 = scmp.ne.s32.totalorder %s46, %s48
      %p52 = scmp.eq.s32.totalorder %s12, 0
      %p53 = por %p51, %p52
      %p54 = scmp.ne.s32.totalorder %s46, %s48
      %p55 = scmp.eq.s32.totalorder %s17, 1
      %p56 = por %p54, %p55
      %p57 = scmp.ne.s32.totalorder %s48, %s49
      %p58 = scmp.eq.s32.totalorder %s17, 0
      %p59 = por %p57, %p58
      %p60 = scmp.ne.s32.totalorder %s48, %s49
      %p61 = scmp.eq.s32.totalorder %s18, 1
      %p62 = por %p60, %p61
      %p64 = scmp.ne.s32.totalorder %s49, %s63
      %p65 = scmp.eq.s32.totalorder %s18, 0
      %p66 = por %p64, %p65
      %s68 = sadd.s32 %s67, 1
      %p71 = scmp.eq.s32.totalorder %s12, 1
      %p72 = scmp.ne.s32.totalorder %s67, %s69
      %p73 = scmp.eq.s32.totalorder %s12, 0
      %p74 = por %p72, %p73
      %p75 = scmp.ne.s32.totalorder %s67, %s69
      %p76 = scmp.eq.s32.totalorder %s17, 1
      %p77 = por %p75, %p76
      %p78 = scmp.ne.s32.totalorder %s69, %s70
      %p79 = scmp.eq.s32.totalorder %s17, 0
      %p80 = por %p78, %p79
      %p81 = scmp.ne.s32.totalorder %s69, %s70
      %p82 = scmp.eq.s32.totalorder %s18, 1
      %p83 = por %p81, %p82
      %p85 = scmp.ne.s32.totalorder %s70, %s84
      %p86 = scmp.eq.s32.totalorder %s18, 0
      %p87 = por %p85, %p86
      %s88 = ssub.s32 %s12, %s19
      %p89 = scmp.eq.s32.totalorder %s88, 0
      %s91 = sadd.s32 %s90, 1
      %s92 = scalar_select %p89, %s90, %s91
      %p95 = pneg %p89
      %p96 = scmp.eq.s32.totalorder %s12, 1
      %p97 = por %p95, %p96
      %p98 = scmp.ne.s32.totalorder %s90, %s93
      %p99 = scmp.eq.s32.totalorder %s12, 0
      %p100 = por %p98, %p99
      %p101 = scmp.ne.s32.totalorder %s90, %s93
      %p102 = scmp.eq.s32.totalorder %s17, 1
      %p103 = por %p101, %p102
      %p104 = scmp.ne.s32.totalorder %s93, %s94
      %p105 = scmp.eq.s32.totalorder %s17, 0
      %p106 = por %p104, %p105
      %p107 = scmp.ne.s32.totalorder %s93, %s94
      %p108 = scmp.eq.s32.totalorder %s18, 1
      %p109 = por %p107, %p108
      %p111 = scmp.ne.s32.totalorder %s94, %s110
      %p112 = scmp.eq.s32.totalorder %s18, 0
      %p113 = por %p111, %p112
      %p114 = scmp.le.s32.totalorder 1, %s12
      %p115 = scmp.lt.s32.totalorder %s12, 3
      %p116 = pnand %p114, %p115
      %p117 = pneg %p116
      // Predicated region
      $region9: #{tpu_custom_call.1} parent=5 // pred_check
        _
      $region10: #{tpu_custom_call.1} parent=5 // pred_check_branch
        %119 = sbr.rel (%p116) target = $region12
      $region11: #{tpu_custom_call.1} parent=5 // pred_region
        %s120 = ssub.s32 %s12, 1
        // Predicated region
        $region13: #{tpu_custom_call.1} parent=11 // pred_check
          %p121 = pneg %p59
        $region14: #{tpu_custom_call.1} parent=11 // pred_check_branch
          %123 = sbr.rel (%p121) target = $region16
        $region15: #{tpu_custom_call.1} parent=11 // pred_region
          _
        $region16: #{tpu_custom_call.1} parent=11 // pred_fallthru
          _
        // Predicated region
        $region17: #{tpu_custom_call.1} parent=11 // pred_check
          %p124 = pneg %p80
        $region18: #{tpu_custom_call.1} parent=11 // pred_check_branch
          %126 = sbr.rel (%p124) target = $region20
        $region19: #{tpu_custom_call.1} parent=11 // pred_region
          _
        $region20: #{tpu_custom_call.1} parent=11 // pred_fallthru
          _
      $region12: #{tpu_custom_call.1} parent=5 // pred_fallthru
        _
      %p127 = scmp.lt.s32.totalorder %s12, 2
      // Predicated region
      $region21: #{tpu_custom_call.1} parent=5 // pred_check
        %p128 = pneg %p127
      $region22: #{tpu_custom_call.1} parent=5 // pred_check_branch
        %130 = sbr.rel (%p128) target = $region24
      $region23: #{tpu_custom_call.1} parent=5 // pred_region
        // Predicated region
        $region25: #{tpu_custom_call.1} parent=23 // pred_check
          %p131 = pneg %p32
        $region26: #{tpu_custom_call.1} parent=23 // pred_check_branch
          %133 = sbr.rel (%p131) target = $region28
        $region27: #{tpu_custom_call.1} parent=23 // pred_region
          %p134 = scmp.lt.s32.totalorder %s12, 1
          %s135 = scalar_select %p134, %s12, 1
          %s136 = smul.addr %s135, 8
          %s137 = smul.addr %s136, 8
          %s138 = scalar_lea.vmem %s0, %s137
        $region28: #{tpu_custom_call.1} parent=23 // pred_fallthru
          _
      $region24: #{tpu_custom_call.1} parent=5 // pred_fallthru
        _
      %p139 = scmp.le.s32.totalorder 1, %s12
      %p140 = scmp.lt.s32.totalorder %s12, 3
      %p141 = pnand %p139, %p140
      %p142 = pneg %p141
      // Predicated region
      $region29: #{tpu_custom_call.1} parent=5 // pred_check
        _
      $region30: #{tpu_custom_call.1} parent=5 // pred_check_branch
        %144 = sbr.rel (%p141) target = $region32
      $region31: #{tpu_custom_call.1} parent=5 // pred_region
        %s145 = ssub.s32 %s12, 1
        %p146 = scmp.lt.s32.totalorder %s17, 1
        %s147 = scalar_select %p146, %s17, 1
        %s148 = smul.addr %s147, 8
        %s149 = smul.addr %s148, 8
        %s150 = scalar_lea.vmem %s0, %s149
        %p151 = pneg %p38
        %p152 = pneg %p35
        %p153 = pneg %p59
        %p154 = pneg %p56
        %p155 = pneg %p80
        %p156 = pneg %p77
        %p157 = pneg %p106
        %p158 = pneg %p103
        %s159 = sand.u32 %s93, 1
        %s160 = scalar_lea.sflag [#allocation4], %s159
        %s161 = sand.u32 %s93, 1
        %s162 = smul.addr %s161, 64
        %s163 = scalar_lea.vmem [#allocation3], %s162
        %p164 = scmp.lt.s32.totalorder %s17, 1
        %s165 = scalar_select %p164, %s17, 1
        %s166 = smul.addr %s165, 8
        %s167 = smul.addr %s166, 8
        %s168 = scalar_lea.vmem %s0, %s167
        %v170 = vld [vmem:[%s168] sm:$0xff]
        %v171 = vld [vmem:[%s168 + $0x8] sm:$0xff]
        %v172 = vld [vmem:[%s168 + $0x10] sm:$0xff]
        %v173 = vld [vmem:[%s168 + $0x18] sm:$0xff]
        %v174 = vld [vmem:[%s168 + $0x20] sm:$0xff]
        %v175 = vld [vmem:[%s168 + $0x28] sm:$0xff]
        %v176 = vld [vmem:[%s168 + $0x30] sm:$0xff]
        %v177 = vld [vmem:[%s168 + $0x38] sm:$0xff]
        %vm178 = vcmp.ge.f32.partialorder %v170, 0.0
        %vm179 = vcmp.ge.f32.partialorder %v171, 0.0
        %vm180 = vcmp.ge.f32.partialorder %v172, 0.0
        %vm181 = vcmp.ge.f32.partialorder %v173, 0.0
        %vm182 = vcmp.ge.f32.partialorder %v174, 0.0
        %vm183 = vcmp.ge.f32.partialorder %v175, 0.0
        %vm184 = vcmp.ge.f32.partialorder %v176, 0.0
        %vm185 = vcmp.ge.f32.partialorder %v177, 0.0
        %v186 = vmul.f32 %v170, 0.2
        %v187 = vmul.f32 %v171, 0.2
        %v188 = vmul.f32 %v172, 0.2
        %v189 = vmul.f32 %v173, 0.2
        %v190 = vmul.f32 %v174, 0.2
        %v191 = vmul.f32 %v175, 0.2
        %v192 = vmul.f32 %v176, 0.2
        %v193 = vmul.f32 %v177, 0.2
        %v194 = vsel %vm178, %v170, %v186
        %v195 = vsel %vm179, %v171, %v187
        %v196 = vsel %vm180, %v172, %v188
        %v197 = vsel %vm181, %v173, %v189
        %v198 = vsel %vm182, %v174, %v190
        %v199 = vsel %vm183, %v175, %v191
        %v200 = vsel %vm184, %v176, %v192
        %v201 = vsel %vm185, %v177, %v193
        %vm202 = vcmask 146432
        %203 = vst.msk [vmem:[#allocation2] sm:$0xff] %vm202, 0.0
        %204 = vst.msk [vmem:[#allocation2 + $0x8] sm:$0xff] %vm202, 0.0
        %vm205 = vcmask 140288
        %206 = vst.msk [vmem:[#allocation2 + $0x10] sm:$0x3] %vm205, 0.0
        %207 = vst.msk [vmem:[#allocation2 + $0x18] sm:$0xff] %vm202, 0.0
        %208 = vst.msk [vmem:[#allocation2 + $0x20] sm:$0xff] %vm202, 0.0
        %209 = vst.msk [vmem:[#allocation2 + $0x28] sm:$0x3] %vm205, 0.0
        %210 = vst.msk [vmem:[#allocation2 + $0x30] sm:$0xff] %vm202, 0.0
        %211 = vst.msk [vmem:[#allocation2 + $0x38] sm:$0xff] %vm202, 0.0
        %212 = vst.msk [vmem:[#allocation2 + $0x40] sm:$0x3] %vm205, 0.0
        %213 = vst.msk [vmem:[#allocation2 + $0x48] sm:$0xff] %vm202, 0.0
        %214 = vst.msk [vmem:[#allocation2 + $0x50] sm:$0xff] %vm202, 0.0
        %215 = vst.msk [vmem:[#allocation2 + $0x58] sm:$0x3] %vm205, 0.0
        %224 = vrot.lane.b32.xlu0 %v194, 1
        %v225 = vpop.permute.xlu0 %224
        %226 = vrot.lane.b32.xlu0 %v195, 1
        %v227 = vpop.permute.xlu0 %226
        %228 = vrot.lane.b32.xlu0 %v196, 1
        %v229 = vpop.permute.xlu0 %228
        %230 = vrot.lane.b32.xlu0 %v197, 1
        %v231 = vpop.permute.xlu0 %230
        %232 = vrot.lane.b32.xlu0 %v198, 1
        %v233 = vpop.permute.xlu0 %232
        %234 = vrot.lane.b32.xlu0 %v199, 1
        %v235 = vpop.permute.xlu0 %234
        %236 = vrot.lane.b32.xlu0 %v200, 1
        %v237 = vpop.permute.xlu0 %236
        %238 = vrot.lane.b32.xlu0 %v201, 1
        %v239 = vpop.permute.xlu0 %238
        %vm248 = vcmask 138248
        %249 = vst.msk [vmem:[#allocation2 + $0x1] sm:$0xff] %vm248, %v225
        %250 = vst.msk [vmem:[#allocation2 + $0x9] sm:$0xff] %vm248, %v227
        %251 = vst.msk [vmem:[#allocation2 + $0x19] sm:$0xff] %vm248, %v229
        %252 = vst.msk [vmem:[#allocation2 + $0x21] sm:$0xff] %vm248, %v231
        %253 = vst.msk [vmem:[#allocation2 + $0x31] sm:$0xff] %vm248, %v233
        %254 = vst.msk [vmem:[#allocation2 + $0x39] sm:$0xff] %vm248, %v235
        %255 = vst.msk [vmem:[#allocation2 + $0x49] sm:$0xff] %vm248, %v237
        %256 = vst.msk [vmem:[#allocation2 + $0x51] sm:$0xff] %vm248, %v239
        %v257 = vld [vmem:[%s2] sm:$0xff]
        %v258 = vld [vmem:[%s2 + $0x8] sm:$0xff]
        %v259 = vld [vmem:[%s2 + $0x10] sm:$0xff]
        %v260 = vld [vmem:[%s2 + $0x18] sm:$0xff]
        %262 = vset.pattern.permute.xlu0 0
        %263 = vperm.xlu0 %262, %v257
        %v264 = vpop.permute.xlu0 %263
        %267 = vset.pattern.permute.xlu0 0
        %268 = vperm.xlu0 %267, %v258
        %v269 = vpop.permute.xlu0 %268
        %272 = vset.pattern.permute.xlu0 0
        %273 = vperm.xlu0 %272, %v259
        %v274 = vpop.permute.xlu0 %273
        %277 = vset.pattern.permute.xlu0 0
        %278 = vperm.xlu0 %277, %v260
        %v279 = vpop.permute.xlu0 %278
        %v281 = vld [vmem:[#allocation2] sm:$0xff]
        %v282 = vld [vmem:[#allocation2 + $0x8] sm:$0xff]
        %v283 = vld [vmem:[#allocation2 + $0x18] sm:$0xff]
        %v284 = vld [vmem:[#allocation2 + $0x20] sm:$0xff]
        %v285 = vld [vmem:[#allocation2 + $0x30] sm:$0xff]
        %v286 = vld [vmem:[#allocation2 + $0x38] sm:$0xff]
        %v287 = vld [vmem:[#allocation2 + $0x48] sm:$0xff]
        %v288 = vld [vmem:[#allocation2 + $0x50] sm:$0xff]
        %v289 = vcombine.low %v281, %v285
        %v290 = vcombine.high %v281, %v285
        %v292 = vunpack.c.l.s4 1983009808
        %v293 = vunpack.c.0.s8 %v292
        %v294 = vlaneseq
        %v295 = vshrl.u32 %v294, 7
        %v296 = vsub.s32 %v293, %v295
        %v297 = vrot.slane %v289, %v296
        %v299 = vunpack.c.l.s4 1983009808
        %v300 = vunpack.c.0.s8 %v299
        %v301 = vlaneseq
        %v302 = vshrl.u32 %v301, 7
        %v303 = vsub.s32 %v300, %v302
        %v304 = vrot.slane %v290, %v303
        %v305 = vcombine.low %v283, %v287
        %v306 = vcombine.high %v283, %v287
        %v308 = vunpack.c.l.s4 1983009808
        %v309 = vunpack.c.0.s8 %v308
        %v310 = vlaneseq
        %v311 = vshrl.u32 %v310, 7
        %v312 = vsub.s32 %v309, %v311
        %v313 = vrot.slane %v305, %v312
        %v315 = vunpack.c.l.s4 1983009808
        %v316 = vunpack.c.0.s8 %v315
        %v317 = vlaneseq
        %v318 = vshrl.u32 %v317, 7
        %v319 = vsub.s32 %v316, %v318
        %v320 = vrot.slane %v306, %v319
        %v321 = vcombine.low %v297, %v313
        %v322 = vcombine.high %v297, %v313
        %v324 = vunpack.c.l.s4 1934713408
        %v325 = vunpack.c.0.s8 %v324
        %v326 = vlaneseq
        %v327 = vshrl.u32 %v326, 7
        %v328 = vsub.s32 %v325, %v327
        %v329 = vrot.slane %v321, %v328
        %v331 = vunpack.c.l.s4 1934713408
        %v332 = vunpack.c.0.s8 %v331
        %v333 = vlaneseq
        %v334 = vshrl.u32 %v333, 7
        %v335 = vsub.s32 %v332, %v334
        %v336 = vrot.slane %v322, %v335
        %v337 = vcombine.low %v304, %v320
        %v338 = vcombine.high %v304, %v320
        %v340 = vunpack.c.l.s4 1934713408
        %v341 = vunpack.c.0.s8 %v340
        %v342 = vlaneseq
        %v343 = vshrl.u32 %v342, 7
        %v344 = vsub.s32 %v341, %v343
        %v345 = vrot.slane %v337, %v344
        %v347 = vunpack.c.l.s4 1934713408
        %v348 = vunpack.c.0.s8 %v347
        %v349 = vlaneseq
        %v350 = vshrl.u32 %v349, 7
        %v351 = vsub.s32 %v348, %v350
        %v352 = vrot.slane %v338, %v351
        %v353 = vcombine.high %v329, 0.0
        %v354 = vcombine.high %v336, 0.0
        %v355 = vcombine.high %v345, 0.0
        %v356 = vcombine.high %v352, 0.0
        %v357 = vcombine.low %v282, %v286
        %v358 = vcombine.high %v282, %v286
        %v360 = vunpack.c.l.s4 1983009808
        %v361 = vunpack.c.0.s8 %v360
        %v362 = vlaneseq
        %v363 = vshrl.u32 %v362, 7
        %v364 = vsub.s32 %v361, %v363
        %v365 = vrot.slane %v357, %v364
        %v367 = vunpack.c.l.s4 1983009808
        %v368 = vunpack.c.0.s8 %v367
        %v369 = vlaneseq
        %v370 = vshrl.u32 %v369, 7
        %v371 = vsub.s32 %v368, %v370
        %v372 = vrot.slane %v358, %v371
        %v373 = vcombine.low %v284, %v288
        %v374 = vcombine.high %v284, %v288
        %v376 = vunpack.c.l.s4 1983009808
        %v377 = vunpack.c.0.s8 %v376
        %v378 = vlaneseq
        %v379 = vshrl.u32 %v378, 7
        %v380 = vsub.s32 %v377, %v379
        %v381 = vrot.slane %v373, %v380
        %v383 = vunpack.c.l.s4 1983009808
        %v384 = vunpack.c.0.s8 %v383
        %v385 = vlaneseq
        %v386 = vshrl.u32 %v385, 7
        %v387 = vsub.s32 %v384, %v386
        %v388 = vrot.slane %v374, %v387
        %v389 = vcombine.low %v365, %v381
        %v390 = vcombine.high %v365, %v381
        %v392 = vunpack.c.l.s4 1934713408
        %v393 = vunpack.c.0.s8 %v392
        %v394 = vlaneseq
        %v395 = vshrl.u32 %v394, 7
        %v396 = vsub.s32 %v393, %v395
        %v397 = vrot.slane %v389, %v396
        %v399 = vunpack.c.l.s4 1934713408
        %v400 = vunpack.c.0.s8 %v399
        %v401 = vlaneseq
        %v402 = vshrl.u32 %v401, 7
        %v403 = vsub.s32 %v400, %v402
        %v404 = vrot.slane %v390, %v403
        %v405 = vcombine.low %v372, %v388
        %v406 = vcombine.high %v372, %v388
        %v408 = vunpack.c.l.s4 1934713408
        %v409 = vunpack.c.0.s8 %v408
        %v410 = vlaneseq
        %v411 = vshrl.u32 %v410, 7
        %v412 = vsub.s32 %v409, %v411
        %v413 = vrot.slane %v405, %v412
        %v415 = vunpack.c.l.s4 1934713408
        %v416 = vunpack.c.0.s8 %v415
        %v417 = vlaneseq
        %v418 = vshrl.u32 %v417, 7
        %v419 = vsub.s32 %v416, %v418
        %v420 = vrot.slane %v406, %v419
        %v421 = vcombine.high %v397, 0.0
        %v422 = vcombine.high %v404, 0.0
        %v423 = vcombine.high %v413, 0.0
        %v424 = vcombine.high %v420, 0.0
        %426 = vrot.lane.b32.xlu0 %v353, 16
        %v427 = vpop.permute.xlu0 %426
        %430 = vrot.lane.b32.xlu0 %v336, 32
        %v431 = vpop.permute.xlu0 %430
        %434 = vrot.lane.b32.xlu0 %v354, 48
        %v435 = vpop.permute.xlu0 %434
        %438 = vrot.lane.b32.xlu0 %v345, 64
        %v439 = vpop.permute.xlu0 %438
        %442 = vrot.lane.b32.xlu0 %v355, 80
        %v443 = vpop.permute.xlu0 %442
        %446 = vrot.lane.b32.xlu0 %v352, 96
        %v447 = vpop.permute.xlu0 %446
        %450 = vrot.lane.b32.xlu0 %v356, 112
        %v451 = vpop.permute.xlu0 %450
        %454 = vrot.lane.b32.xlu0 %v421, 16
        %v455 = vpop.permute.xlu0 %454
        %458 = vrot.lane.b32.xlu0 %v404, 32
        %v459 = vpop.permute.xlu0 %458
        %462 = vrot.lane.b32.xlu0 %v422, 48
        %v463 = vpop.permute.xlu0 %462
        %466 = vrot.lane.b32.xlu0 %v413, 64
        %v467 = vpop.permute.xlu0 %466
        %470 = vrot.lane.b32.xlu0 %v423, 80
        %v471 = vpop.permute.xlu0 %470
        %474 = vrot.lane.b32.xlu0 %v420, 96
        %v475 = vpop.permute.xlu0 %474
        %478 = vrot.lane.b32.xlu0 %v424, 112
        %v479 = vpop.permute.xlu0 %478
        %vm481 = vcmask 130048
        %v482 = vsel %vm481, %v329, %v427
        %vm483 = vcmask 261120
        %v484 = vsel %vm483, %v482, %v431
        %vm485 = vcmask 392192
        %v486 = vsel %vm485, %v484, %v435
        %vm487 = vcmask 523264
        %v488 = vsel %vm487, %v486, %v439
        %vm489 = vcmask 654336
        %v490 = vsel %vm489, %v488, %v443
        %vm491 = vcmask 785408
        %v492 = vsel %vm491, %v490, %v447
        %vm493 = vcmask 916480
        %v494 = vsel %vm493, %v492, %v451
        %v495 = vsel %vm481, %v397, %v455
        %v496 = vsel %vm483, %v495, %v459
        %v497 = vsel %vm485, %v496, %v463
        %v498 = vsel %vm487, %v497, %v467
        %v499 = vsel %vm489, %v498, %v471
        %v500 = vsel %vm491, %v499, %v475
        %v501 = vsel %vm493, %v500, %v479
        %v502 = vpack.c.bf16 %v494, %v494
        %v503 = vpack.c.bf16 %v501, %v501
        %v504 = vld [vmem:[%s1] sm:$0xf]
        %v505 = vld [vmem:[%s1 + $0x4] sm:$0xf]
        %v506 = vld [vmem:[%s1 + $0x8] sm:$0xf]
        %v507 = vld [vmem:[%s1 + $0xc] sm:$0xf]
        %v512 = vunpack.c.l.b16 %v504
        %v513 = vunpack.c.l.b16 %v505
        %v514 = vunpack.c.l.b16 %v506
        %v515 = vunpack.c.l.b16 %v507
        %v516 = vpack.c.b16 %v513, %v512
        %v517 = vpack.c.b16 %v515, %v514
        %vm518 = vcmask 31744
        %v520 = vsel %vm518, %v516, 0
        %v523 = vsel %vm518, %v517, 0
        %vm525 = vcmask 1041408
        %v527 = vsel %vm525, %v502, 0
        %v530 = vsel %vm525, %v503, 0
        %532 = vmatprep.subr.bf16.mxu0 %v530
        %533 = vmatpush1.bf16.msra.mxu0 %v527
        %534 = vmatprep.subr.bf16.mxu0 0
        %535 = vmatpush1.bf16.msra.mxu0 0
        %536 = vmatprep.subr.bf16.mxu0 0
        %537 = vmatpush1.bf16.msra.mxu0 0
        %538 = vmatprep.subr.bf16.mxu0 0
        %539 = vmatpush1.bf16.msra.mxu0 0
        %540 = vmatprep.subr.bf16.mxu0 0
        %541 = vmatpush1.bf16.msra.mxu0 0
        %542 = vmatprep.subr.bf16.mxu0 0
        %543 = vmatpush1.bf16.msra.mxu0 0
        %544 = vmatprep.subr.bf16.mxu0 0
        %545 = vmatpush1.bf16.msra.mxu0 0
        %546 = vmatprep.subr.bf16.mxu0 0
        %547 = vmatpush1.bf16.msra.mxu0 0
        %548 = vmatprep.subr.bf16.mxu0 0
        %549 = vmatpush1.bf16.msra.mxu0 0
        %550 = vmatprep.subr.bf16.mxu0 0
        %551 = vmatpush1.bf16.msra.mxu0 0
        %552 = vmatprep.subr.bf16.mxu0 0
        %553 = vmatpush1.bf16.msra.mxu0 0
        %554 = vmatprep.subr.bf16.mxu0 0
        %555 = vmatpush1.bf16.msra.mxu0 0
        %556 = vmatprep.subr.bf16.mxu0 0
        %557 = vmatpush1.bf16.msra.mxu0 0
        %558 = vmatprep.subr.bf16.mxu0 0
        %559 = vmatpush1.bf16.msra.mxu0 0
        %560 = vmatprep.subr.bf16.mxu0 0
        %561 = vmatpush1.bf16.msra.mxu0 0
        %562 = vmatprep.subr.bf16.mxu0 0
        %563 = vmatpush1.bf16.msra.mxu0 0
        %564 = vmatprep.mubr.bf16.mxu0 0
        %565 = vmatmul.mubr.bf16.gmra.mrb[0].mxu0 %v520
        %v566 = vpop.f32.mrb[0].mxu0
        %v567 = vadd.f32 0.0, %v566
        %v568 = vpop.f32.mrb[0].mxu0
        %v569 = vadd.f32 0.0, %v568
        %v570 = vpop.f32.mrb[0].mxu0
        %v571 = vadd.f32 0.0, %v570
        %v572 = vpop.f32.mrb[0].mxu0
        %v573 = vadd.f32 0.0, %v572
        %574 = vmatprep.mubr.bf16.mxu0 0
        %575 = vmatmul.mubr.bf16.gmra.mrb[0].mxu0 %v523
        %v576 = vpop.f32.mrb[0].mxu0
        %v577 = vadd.f32 0.0, %v576
        %v578 = vpop.f32.mrb[0].mxu0
        %v579 = vadd.f32 0.0, %v578
        %v580 = vpop.f32.mrb[0].mxu0
        %v581 = vadd.f32 0.0, %v580
        %v582 = vpop.f32.mrb[0].mxu0
        %v583 = vadd.f32 0.0, %v582
        %584 = vdwg.mxu0
        %v585 = vadd.f32 %v264, %v567
        %v586 = vadd.f32 %v264, %v569
        %v587 = vadd.f32 %v269, %v571
        %v588 = vadd.f32 %v269, %v573
        %v589 = vadd.f32 %v274, %v577
        %v590 = vadd.f32 %v274, %v579
        %v591 = vadd.f32 %v279, %v581
        %v592 = vadd.f32 %v279, %v583
        %v593 = vld [vmem:[#allocation2] sm:$0xff]
        %v594 = vld [vmem:[#allocation2 + $0x8] sm:$0xff]
        %v595 = vld [vmem:[#allocation2 + $0x18] sm:$0xff]
        %v596 = vld [vmem:[#allocation2 + $0x20] sm:$0xff]
        %v597 = vld [vmem:[#allocation2 + $0x30] sm:$0xff]
        %v598 = vld [vmem:[#allocation2 + $0x38] sm:$0xff]
        %v599 = vld [vmem:[#allocation2 + $0x48] sm:$0xff]
        %v600 = vld [vmem:[#allocation2 + $0x50] sm:$0xff]
        %609 = vrot.lane.b32.xlu0 %v593, 127
        %v610 = vpop.permute.xlu0 %609
        %611 = vrot.lane.b32.xlu0 %v594, 127
        %v612 = vpop.permute.xlu0 %611
        %613 = vrot.lane.b32.xlu0 %v595, 127
        %v614 = vpop.permute.xlu0 %613
        %615 = vrot.lane.b32.xlu0 %v596, 127
        %v616 = vpop.permute.xlu0 %615
        %617 = vrot.lane.b32.xlu0 %v597, 127
        %v618 = vpop.permute.xlu0 %617
        %619 = vrot.lane.b32.xlu0 %v598, 127
        %v620 = vpop.permute.xlu0 %619
        %621 = vrot.lane.b32.xlu0 %v599, 127
        %v622 = vpop.permute.xlu0 %621
        %623 = vrot.lane.b32.xlu0 %v600, 127
        %v624 = vpop.permute.xlu0 %623
        %v633 = vcombine.low %v610, %v618
        %v634 = vcombine.high %v610, %v618
        %v636 = vunpack.c.l.s4 1983009808
        %v637 = vunpack.c.0.s8 %v636
        %v638 = vlaneseq
        %v639 = vshrl.u32 %v638, 7
        %v640 = vsub.s32 %v637, %v639
        %v641 = vrot.slane %v633, %v640
        %v643 = vunpack.c.l.s4 1983009808
        %v644 = vunpack.c.0.s8 %v643
        %v645 = vlaneseq
        %v646 = vshrl.u32 %v645, 7
        %v647 = vsub.s32 %v644, %v646
        %v648 = vrot.slane %v634, %v647
        %v649 = vcombine.low %v614, %v622
        %v650 = vcombine.high %v614, %v622
        %v652 = vunpack.c.l.s4 1983009808
        %v653 = vunpack.c.0.s8 %v652
        %v654 = vlaneseq
        %v655 = vshrl.u32 %v654, 7
        %v656 = vsub.s32 %v653, %v655
        %v657 = vrot.slane %v649, %v656
        %v659 = vunpack.c.l.s4 1983009808
        %v660 = vunpack.c.0.s8 %v659
        %v661 = vlaneseq
        %v662 = vshrl.u32 %v661, 7
        %v663 = vsub.s32 %v660, %v662
        %v664 = vrot.slane %v650, %v663
        %v665 = vcombine.low %v641, %v657
        %v666 = vcombine.high %v641, %v657
        %v668 = vunpack.c.l.s4 1934713408
        %v669 = vunpack.c.0.s8 %v668
        %v670 = vlaneseq
        %v671 = vshrl.u32 %v670, 7
        %v672 = vsub.s32 %v669, %v671
        %v673 = vrot.slane %v665, %v672
        %v675 = vunpack.c.l.s4 1934713408
        %v676 = vunpack.c.0.s8 %v675
        %v677 = vlaneseq
        %v678 = vshrl.u32 %v677, 7
        %v679 = vsub.s32 %v676, %v678
        %v680 = vrot.slane %v666, %v679
        %v681 = vcombine.low %v648, %v664
        %v682 = vcombine.high %v648, %v664
        %v684 = vunpack.c.l.s4 1934713408
        %v685 = vunpack.c.0.s8 %v684
        %v686 = vlaneseq
        %v687 = vshrl.u32 %v686, 7
        %v688 = vsub.s32 %v685, %v687
        %v689 = vrot.slane %v681, %v688
        %v691 = vunpack.c.l.s4 1934713408
        %v692 = vunpack.c.0.s8 %v691
        %v693 = vlaneseq
        %v694 = vshrl.u32 %v693, 7
        %v695 = vsub.s32 %v692, %v694
        %v696 = vrot.slane %v682, %v695
        %v697 = vcombine.high %v673, 0.0
        %v698 = vcombine.high %v680, 0.0
        %v699 = vcombine.high %v689, 0.0
        %v700 = vcombine.high %v696, 0.0
        %v701 = vcombine.low %v612, %v620
        %v702 = vcombine.high %v612, %v620
        %v704 = vunpack.c.l.s4 1983009808
        %v705 = vunpack.c.0.s8 %v704
        %v706 = vlaneseq
        %v707 = vshrl.u32 %v706, 7
        %v708 = vsub.s32 %v705, %v707
        %v709 = vrot.slane %v701, %v708
        %v711 = vunpack.c.l.s4 1983009808
        %v712 = vunpack.c.0.s8 %v711
        %v713 = vlaneseq
        %v714 = vshrl.u32 %v713, 7
        %v715 = vsub.s32 %v712, %v714
        %v716 = vrot.slane %v702, %v715
        %v717 = vcombine.low %v616, %v624
        %v718 = vcombine.high %v616, %v624
        %v720 = vunpack.c.l.s4 1983009808
        %v721 = vunpack.c.0.s8 %v720
        %v722 = vlaneseq
        %v723 = vshrl.u32 %v722, 7
        %v724 = vsub.s32 %v721, %v723
        %v725 = vrot.slane %v717, %v724
        %v727 = vunpack.c.l.s4 1983009808
        %v728 = vunpack.c.0.s8 %v727
        %v729 = vlaneseq
        %v730 = vshrl.u32 %v729, 7
        %v731 = vsub.s32 %v728, %v730
        %v732 = vrot.slane %v718, %v731
        %v733 = vcombine.low %v709, %v725
        %v734 = vcombine.high %v709, %v725
        %v736 = vunpack.c.l.s4 1934713408
        %v737 = vunpack.c.0.s8 %v736
        %v738 = vlaneseq
        %v739 = vshrl.u32 %v738, 7
        %v740 = vsub.s32 %v737, %v739
        %v741 = vrot.slane %v733, %v740
        %v743 = vunpack.c.l.s4 1934713408
        %v744 = vunpack.c.0.s8 %v743
        %v745 = vlaneseq
        %v746 = vshrl.u32 %v745, 7
        %v747 = vsub.s32 %v744, %v746
        %v748 = vrot.slane %v734, %v747
        %v749 = vcombine.low %v716, %v732
        %v750 = vcombine.high %v716, %v732
        %v752 = vunpack.c.l.s4 1934713408
        %v753 = vunpack.c.0.s8 %v752
        %v754 = vlaneseq
        %v755 = vshrl.u32 %v754, 7
        %v756 = vsub.s32 %v753, %v755
        %v757 = vrot.slane %v749, %v756
        %v759 = vunpack.c.l.s4 1934713408
        %v760 = vunpack.c.0.s8 %v759
        %v761 = vlaneseq
        %v762 = vshrl.u32 %v761, 7
        %v763 = vsub.s32 %v760, %v762
        %v764 = vrot.slane %v750, %v763
        %v765 = vcombine.high %v741, 0.0
        %v766 = vcombine.high %v748, 0.0
        %v767 = vcombine.high %v757, 0.0
        %v768 = vcombine.high %v764, 0.0
        %770 = vrot.lane.b32.xlu0 %v697, 16
        %v771 = vpop.permute.xlu0 %770
        %774 = vrot.lane.b32.xlu0 %v680, 32
        %v775 = vpop.permute.xlu0 %774
        %778 = vrot.lane.b32.xlu0 %v698, 48
        %v779 = vpop.permute.xlu0 %778
        %782 = vrot.lane.b32.xlu0 %v689, 64
        %v783 = vpop.permute.xlu0 %782
        %786 = vrot.lane.b32.xlu0 %v699, 80
        %v787 = vpop.permute.xlu0 %786
        %790 = vrot.lane.b32.xlu0 %v696, 96
        %v791 = vpop.permute.xlu0 %790
        %794 = vrot.lane.b32.xlu0 %v700, 112
        %v795 = vpop.permute.xlu0 %794
        %798 = vrot.lane.b32.xlu0 %v765, 16
        %v799 = vpop.permute.xlu0 %798
        %802 = vrot.lane.b32.xlu0 %v748, 32
        %v803 = vpop.permute.xlu0 %802
        %806 = vrot.lane.b32.xlu0 %v766, 48
        %v807 = vpop.permute.xlu0 %806
        %810 = vrot.lane.b32.xlu0 %v757, 64
        %v811 = vpop.permute.xlu0 %810
        %814 = vrot.lane.b32.xlu0 %v767, 80
        %v815 = vpop.permute.xlu0 %814
        %818 = vrot.lane.b32.xlu0 %v764, 96
        %v819 = vpop.permute.xlu0 %818
        %822 = vrot.lane.b32.xlu0 %v768, 112
        %v823 = vpop.permute.xlu0 %822
        %v825 = vsel %vm481, %v673, %v771
        %v826 = vsel %vm483, %v825, %v775
        %v827 = vsel %vm485, %v826, %v779
        %v828 = vsel %vm487, %v827, %v783
        %v829 = vsel %vm489, %v828, %v787
        %v830 = vsel %vm491, %v829, %v791
        %v831 = vsel %vm493, %v830, %v795
        %v832 = vsel %vm481, %v741, %v799
        %v833 = vsel %vm483, %v832, %v803
        %v834 = vsel %vm485, %v833, %v807
        %v835 = vsel %vm487, %v834, %v811
        %v836 = vsel %vm489, %v835, %v815
        %v837 = vsel %vm491, %v836, %v819
        %v838 = vsel %vm493, %v837, %v823
        %v839 = vpack.c.bf16 %v831, %v831
        %v840 = vpack.c.bf16 %v838, %v838
        %s841 = scalar_lea.vmem %s1, 16
        %v842 = vld [vmem:[%s841] sm:$0xf]
        %v843 = vld [vmem:[%s841 + $0x4] sm:$0xf]
        %v844 = vld [vmem:[%s841 + $0x8] sm:$0xf]
        %v845 = vld [vmem:[%s841 + $0xc] sm:$0xf]
        %v850 = vunpack.c.l.b16 %v842
        %v851 = vunpack.c.l.b16 %v843
        %v852 = vunpack.c.l.b16 %v844
        %v853 = vunpack.c.l.b16 %v845
        %v854 = vpack.c.b16 %v851, %v850
        %v855 = vpack.c.b16 %v853, %v852
        %v857 = vsel %vm518, %v854, 0
        %v860 = vsel %vm518, %v855, 0
        %v863 = vsel %vm525, %v839, 0
        %v866 = vsel %vm525, %v840, 0
        %868 = vmatprep.subr.bf16.mxu0 %v866
        %869 = vmatpush1.bf16.msra.mxu0 %v863
        %870 = vmatprep.subr.bf16.mxu0 0
        %871 = vmatpush1.bf16.msra.mxu0 0
        %872 = vmatprep.subr.bf16.mxu0 0
        %873 = vmatpush1.bf16.msra.mxu0 0
        %874 = vmatprep.subr.bf16.mxu0 0
        %875 = vmatpush1.bf16.msra.mxu0 0
        %876 = vmatprep.subr.bf16.mxu0 0
        %877 = vmatpush1.bf16.msra.mxu0 0
        %878 = vmatprep.subr.bf16.mxu0 0
        %879 = vmatpush1.bf16.msra.mxu0 0
        %880 = vmatprep.subr.bf16.mxu0 0
        %881 = vmatpush1.bf16.msra.mxu0 0
        %882 = vmatprep.subr.bf16.mxu0 0
        %883 = vmatpush1.bf16.msra.mxu0 0
        %884 = vmatprep.subr.bf16.mxu0 0
        %885 = vmatpush1.bf16.msra.mxu0 0
        %886 = vmatprep.subr.bf16.mxu0 0
        %887 = vmatpush1.bf16.msra.mxu0 0
        %888 = vmatprep.subr.bf16.mxu0 0
        %889 = vmatpush1.bf16.msra.mxu0 0
        %890 = vmatprep.subr.bf16.mxu0 0
        %891 = vmatpush1.bf16.msra.mxu0 0
        %892 = vmatprep.subr.bf16.mxu0 0
        %893 = vmatpush1.bf16.msra.mxu0 0
        %894 = vmatprep.subr.bf16.mxu0 0
        %895 = vmatpush1.bf16.msra.mxu0 0
        %896 = vmatprep.subr.bf16.mxu0 0
        %897 = vmatpush1.bf16.msra.mxu0 0
        %898 = vmatprep.subr.bf16.mxu0 0
        %899 = vmatpush1.bf16.msra.mxu0 0
        %900 = vmatprep.mubr.bf16.mxu0 0
        %901 = vmatmul.mubr.bf16.gmra.mrb[0].mxu0 %v857
        %v902 = vpop.f32.mrb[0].mxu0
        %v903 = vadd.f32 0.0, %v902
        %v904 = vpop.f32.mrb[0].mxu0
        %v905 = vadd.f32 0.0, %v904
        %v906 = vpop.f32.mrb[0].mxu0
        %v907 = vadd.f32 0.0, %v906
        %v908 = vpop.f32.mrb[0].mxu0
        %v909 = vadd.f32 0.0, %v908
        %910 = vmatprep.mubr.bf16.mxu0 0
        %911 = vmatmul.mubr.bf16.gmra.mrb[0].mxu0 %v860
        %v912 = vpop.f32.mrb[0].mxu0
        %v913 = vadd.f32 0.0, %v912
        %v914 = vpop.f32.mrb[0].mxu0
        %v915 = vadd.f32 0.0, %v914
        %v916 = vpop.f32.mrb[0].mxu0
        %v917 = vadd.f32 0.0, %v916
        %v918 = vpop.f32.mrb[0].mxu0
        %v919 = vadd.f32 0.0, %v918
        %920 = vdwg.mxu0
        %v921 = vadd.f32 %v585, %v903
        %v922 = vadd.f32 %v586, %v905
        %v923 = vadd.f32 %v587, %v907
        %v924 = vadd.f32 %v588, %v909
        %v925 = vadd.f32 %v589, %v913
        %v926 = vadd.f32 %v590, %v915
        %v927 = vadd.f32 %v591, %v917
        %v928 = vadd.f32 %v592, %v919
        %v929 = vld [vmem:[#allocation2] sm:$0xff]
        %v930 = vld [vmem:[#allocation2 + $0x8] sm:$0xff]
        %v931 = vld [vmem:[#allocation2 + $0x18] sm:$0xff]
        %v932 = vld [vmem:[#allocation2 + $0x20] sm:$0xff]
        %v933 = vld [vmem:[#allocation2 + $0x30] sm:$0xff]
        %v934 = vld [vmem:[#allocation2 + $0x38] sm:$0xff]
        %v935 = vld [vmem:[#allocation2 + $0x48] sm:$0xff]
        %v936 = vld [vmem:[#allocation2 + $0x50] sm:$0xff]
        %945 = vrot.lane.b32.xlu0 %v929, 126
        %v946 = vpop.permute.xlu0 %945
        %947 = vrot.lane.b32.xlu0 %v930, 126
        %v948 = vpop.permute.xlu0 %947
        %949 = vrot.lane.b32.xlu0 %v931, 126
        %v950 = vpop.permute.xlu0 %949
        %951 = vrot.lane.b32.xlu0 %v932, 126
        %v952 = vpop.permute.xlu0 %951
        %953 = vrot.lane.b32.xlu0 %v933, 126
        %v954 = vpop.permute.xlu0 %953
        %955 = vrot.lane.b32.xlu0 %v934, 126
        %v956 = vpop.permute.xlu0 %955
        %957 = vrot.lane.b32.xlu0 %v935, 126
        %v958 = vpop.permute.xlu0 %957
        %959 = vrot.lane.b32.xlu0 %v936, 126
        %v960 = vpop.permute.xlu0 %959
        %v969 = vcombine.low %v946, %v954
        %v970 = vcombine.high %v946, %v954
        %v972 = vunpack.c.l.s4 1983009808
        %v973 = vunpack.c.0.s8 %v972
        %v974 = vlaneseq
        %v975 = vshrl.u32 %v974, 7
        %v976 = vsub.s32 %v973, %v975
        %v977 = vrot.slane %v969, %v976
        %v979 = vunpack.c.l.s4 1983009808
        %v980 = vunpack.c.0.s8 %v979
        %v981 = vlaneseq
        %v982 = vshrl.u32 %v981, 7
        %v983 = vsub.s32 %v980, %v982
        %v984 = vrot.slane %v970, %v983
        %v985 = vcombine.low %v950, %v958
        %v986 = vcombine.high %v950, %v958
        %v988 = vunpack.c.l.s4 1983009808
        %v989 = vunpack.c.0.s8 %v988
        %v990 = vlaneseq
        %v991 = vshrl.u32 %v990, 7
        %v992 = vsub.s32 %v989, %v991
        %v993 = vrot.slane %v985, %v992
        %v995 = vunpack.c.l.s4 1983009808
        %v996 = vunpack.c.0.s8 %v995
        %v997 = vlaneseq
        %v998 = vshrl.u32 %v997, 7
        %v999 = vsub.s32 %v996, %v998
        %v1000 = vrot.slane %v986, %v999
        %v1001 = vcombine.low %v977, %v993
        %v1002 = vcombine.high %v977, %v993
        %v1004 = vunpack.c.l.s4 1934713408
        %v1005 = vunpack.c.0.s8 %v1004
        %v1006 = vlaneseq
        %v1007 = vshrl.u32 %v1006, 7
        %v1008 = vsub.s32 %v1005, %v1007
        %v1009 = vrot.slane %v1001, %v1008
        %v1011 = vunpack.c.l.s4 1934713408
        %v1012 = vunpack.c.0.s8 %v1011
        %v1013 = vlaneseq
        %v1014 = vshrl.u32 %v1013, 7
        %v1015 = vsub.s32 %v1012, %v1014
        %v1016 = vrot.slane %v1002, %v1015
        %v1017 = vcombine.low %v984, %v1000
        %v1018 = vcombine.high %v984, %v1000
        %v1020 = vunpack.c.l.s4 1934713408
        %v1021 = vunpack.c.0.s8 %v1020
        %v1022 = vlaneseq
        %v1023 = vshrl.u32 %v1022, 7
        %v1024 = vsub.s32 %v1021, %v1023
        %v1025 = vrot.slane %v1017, %v1024
        %v1027 = vunpack.c.l.s4 1934713408
        %v1028 = vunpack.c.0.s8 %v1027
        %v1029 = vlaneseq
        %v1030 = vshrl.u32 %v1029, 7
        %v1031 = vsub.s32 %v1028, %v1030
        %v1032 = vrot.slane %v1018, %v1031
        %v1033 = vcombine.high %v1009, 0.0
        %v1034 = vcombine.high %v1016, 0.0
        %v1035 = vcombine.high %v1025, 0.0
        %v1036 = vcombine.high %v1032, 0.0
        %v1037 = vcombine.low %v948, %v956
        %v1038 = vcombine.high %v948, %v956
        %v1040 = vunpack.c.l.s4 1983009808
        %v1041 = vunpack.c.0.s8 %v1040
        %v1042 = vlaneseq
        %v1043 = vshrl.u32 %v1042, 7
        %v1044 = vsub.s32 %v1041, %v1043
        %v1045 = vrot.slane %v1037, %v1044
        %v1047 = vunpack.c.l.s4 1983009808
        %v1048 = vunpack.c.0.s8 %v1047
        %v1049 = vlaneseq
        %v1050 = vshrl.u32 %v1049, 7
        %v1051 = vsub.s32 %v1048, %v1050
        %v1052 = vrot.slane %v1038, %v1051
        %v1053 = vcombine.low %v952, %v960
        %v1054 = vcombine.high %v952, %v960
        %v1056 = vunpack.c.l.s4 1983009808
        %v1057 = vunpack.c.0.s8 %v1056
        %v1058 = vlaneseq
        %v1059 = vshrl.u32 %v1058, 7
        %v1060 = vsub.s32 %v1057, %v1059
        %v1061 = vrot.slane %v1053, %v1060
        %v1063 = vunpack.c.l.s4 1983009808
        %v1064 = vunpack.c.0.s8 %v1063
        %v1065 = vlaneseq
        %v1066 = vshrl.u32 %v1065, 7
        %v1067 = vsub.s32 %v1064, %v1066
        %v1068 = vrot.slane %v1054, %v1067
        %v1069 = vcombine.low %v1045, %v1061
        %v1070 = vcombine.high %v1045, %v1061
        %v1072 = vunpack.c.l.s4 1934713408
        %v1073 = vunpack.c.0.s8 %v1072
        %v1074 = vlaneseq
        %v1075 = vshrl.u32 %v1074, 7
        %v1076 = vsub.s32 %v1073, %v1075
        %v1077 = vrot.slane %v1069, %v1076
        %v1079 = vunpack.c.l.s4 1934713408
        %v1080 = vunpack.c.0.s8 %v1079
        %v1081 = vlaneseq
        %v1082 = vshrl.u32 %v1081, 7
        %v1083 = vsub.s32 %v1080, %v1082
        %v1084 = vrot.slane %v1070, %v1083
        %v1085 = vcombine.low %v1052, %v1068
        %v1086 = vcombine.high %v1052, %v1068
        %v1088 = vunpack.c.l.s4 1934713408
        %v1089 = vunpack.c.0.s8 %v1088
        %v1090 = vlaneseq
        %v1091 = vshrl.u32 %v1090, 7
        %v1092 = vsub.s32 %v1089, %v1091
        %v1093 = vrot.slane %v1085, %v1092
        %v1095 = vunpack.c.l.s4 1934713408
        %v1096 = vunpack.c.0.s8 %v1095
        %v1097 = vlaneseq
        %v1098 = vshrl.u32 %v1097, 7
        %v1099 = vsub.s32 %v1096, %v1098
        %v1100 = vrot.slane %v1086, %v1099
        %v1101 = vcombine.high %v1077, 0.0
        %v1102 = vcombine.high %v1084, 0.0
        %v1103 = vcombine.high %v1093, 0.0
        %v1104 = vcombine.high %v1100, 0.0
        %1106 = vrot.lane.b32.xlu0 %v1033, 16
        %v1107 = vpop.permute.xlu0 %1106
        %1110 = vrot.lane.b32.xlu0 %v1016, 32
        %v1111 = vpop.permute.xlu0 %1110
        %1114 = vrot.lane.b32.xlu0 %v1034, 48
        %v1115 = vpop.permute.xlu0 %1114
        %1118 = vrot.lane.b32.xlu0 %v1025, 64
        %v1119 = vpop.permute.xlu0 %1118
        %1122 = vrot.lane.b32.xlu0 %v1035, 80
        %v1123 = vpop.permute.xlu0 %1122
        %1126 = vrot.lane.b32.xlu0 %v1032, 96
        %v1127 = vpop.permute.xlu0 %1126
        %1130 = vrot.lane.b32.xlu0 %v1036, 112
        %v1131 = vpop.permute.xlu0 %1130
        %1134 = vrot.lane.b32.xlu0 %v1101, 16
        %v1135 = vpop.permute.xlu0 %1134
        %1138 = vrot.lane.b32.xlu0 %v1084, 32
        %v1139 = vpop.permute.xlu0 %1138
        %1142 = vrot.lane.b32.xlu0 %v1102, 48
        %v1143 = vpop.permute.xlu0 %1142
        %1146 = vrot.lane.b32.xlu0 %v1093, 64
        %v1147 = vpop.permute.xlu0 %1146
        %1150 = vrot.lane.b32.xlu0 %v1103, 80
        %v1151 = vpop.permute.xlu0 %1150
        %1154 = vrot.lane.b32.xlu0 %v1100, 96
        %v1155 = vpop.permute.xlu0 %1154
        %1158 = vrot.lane.b32.xlu0 %v1104, 112
        %v1159 = vpop.permute.xlu0 %1158
        %v1161 = vsel %vm481, %v1009, %v1107
        %v1162 = vsel %vm483, %v1161, %v1111
        %v1163 = vsel %vm485, %v1162, %v1115
        %v1164 = vsel %vm487, %v1163, %v1119
        %v1165 = vsel %vm489, %v1164, %v1123
        %v1166 = vsel %vm491, %v1165, %v1127
        %v1167 = vsel %vm493, %v1166, %v1131
        %v1168 = vsel %vm481, %v1077, %v1135
        %v1169 = vsel %vm483, %v1168, %v1139
        %v1170 = vsel %vm485, %v1169, %v1143
        %v1171 = vsel %vm487, %v1170, %v1147
        %v1172 = vsel %vm489, %v1171, %v1151
        %v1173 = vsel %vm491, %v1172, %v1155
        %v1174 = vsel %vm493, %v1173, %v1159
        %v1175 = vpack.c.bf16 %v1167, %v1167
        %v1176 = vpack.c.bf16 %v1174, %v1174
        %s1177 = scalar_lea.vmem %s1, 32
        %v1178 = vld [vmem:[%s1177] sm:$0xf]
        %v1179 = vld [vmem:[%s1177 + $0x4] sm:$0xf]
        %v1180 = vld [vmem:[%s1177 + $0x8] sm:$0xf]
        %v1181 = vld [vmem:[%s1177 + $0xc] sm:$0xf]
        %v1186 = vunpack.c.l.b16 %v1178
        %v1187 = vunpack.c.l.b16 %v1179
        %v1188 = vunpack.c.l.b16 %v1180
        %v1189 = vunpack.c.l.b16 %v1181
        %v1190 = vpack.c.b16 %v1187, %v1186
        %v1191 = vpack.c.b16 %v1189, %v1188
        %v1193 = vsel %vm518, %v1190, 0
        %v1196 = vsel %vm518, %v1191, 0
        %v1199 = vsel %vm525, %v1175, 0
        %v1202 = vsel %vm525, %v1176, 0
        %1204 = vmatprep.subr.bf16.mxu0 %v1202
        %1205 = vmatpush1.bf16.msra.mxu0 %v1199
        %1206 = vmatprep.subr.bf16.mxu0 0
        %1207 = vmatpush1.bf16.msra.mxu0 0
        %1208 = vmatprep.subr.bf16.mxu0 0
        %1209 = vmatpush1.bf16.msra.mxu0 0
        %1210 = vmatprep.subr.bf16.mxu0 0
        %1211 = vmatpush1.bf16.msra.mxu0 0
        %1212 = vmatprep.subr.bf16.mxu0 0
        %1213 = vmatpush1.bf16.msra.mxu0 0
        %1214 = vmatprep.subr.bf16.mxu0 0
        %1215 = vmatpush1.bf16.msra.mxu0 0
        %1216 = vmatprep.subr.bf16.mxu0 0
        %1217 = vmatpush1.bf16.msra.mxu0 0
        %1218 = vmatprep.subr.bf16.mxu0 0
        %1219 = vmatpush1.bf16.msra.mxu0 0
        %1220 = vmatprep.subr.bf16.mxu0 0
        %1221 = vmatpush1.bf16.msra.mxu0 0
        %1222 = vmatprep.subr.bf16.mxu0 0
        %1223 = vmatpush1.bf16.msra.mxu0 0
        %1224 = vmatprep.subr.bf16.mxu0 0
        %1225 = vmatpush1.bf16.msra.mxu0 0
        %1226 = vmatprep.subr.bf16.mxu0 0
        %1227 = vmatpush1.bf16.msra.mxu0 0
        %1228 = vmatprep.subr.bf16.mxu0 0
        %1229 = vmatpush1.bf16.msra.mxu0 0
        %1230 = vmatprep.subr.bf16.mxu0 0
        %1231 = vmatpush1.bf16.msra.mxu0 0
        %1232 = vmatprep.subr.bf16.mxu0 0
        %1233 = vmatpush1.bf16.msra.mxu0 0
        %1234 = vmatprep.subr.bf16.mxu0 0
        %1235 = vmatpush1.bf16.msra.mxu0 0
        %1236 = vmatprep.mubr.bf16.mxu0 0
        %1237 = vmatmul.mubr.bf16.gmra.mrb[0].mxu0 %v1193
        %v1238 = vpop.f32.mrb[0].mxu0
        %v1239 = vadd.f32 0.0, %v1238
        %v1240 = vpop.f32.mrb[0].mxu0
        %v1241 = vadd.f32 0.0, %v1240
        %v1242 = vpop.f32.mrb[0].mxu0
        %v1243 = vadd.f32 0.0, %v1242
        %v1244 = vpop.f32.mrb[0].mxu0
        %v1245 = vadd.f32 0.0, %v1244
        %1246 = vmatprep.mubr.bf16.mxu0 0
        %1247 = vmatmul.mubr.bf16.gmra.mrb[0].mxu0 %v1196
        %v1248 = vpop.f32.mrb[0].mxu0
        %v1249 = vadd.f32 0.0, %v1248
        %v1250 = vpop.f32.mrb[0].mxu0
        %v1251 = vadd.f32 0.0, %v1250
        %v1252 = vpop.f32.mrb[0].mxu0
        %v1253 = vadd.f32 0.0, %v1252
        %v1254 = vpop.f32.mrb[0].mxu0
        %v1255 = vadd.f32 0.0, %v1254
        %1256 = vdwg.mxu0
        %v1257 = vadd.f32 %v921, %v1239
        %v1258 = vadd.f32 %v922, %v1241
        %v1259 = vadd.f32 %v923, %v1243
        %v1260 = vadd.f32 %v924, %v1245
        %v1261 = vadd.f32 %v925, %v1249
        %v1262 = vadd.f32 %v926, %v1251
        %v1263 = vadd.f32 %v927, %v1253
        %v1264 = vadd.f32 %v928, %v1255
        %v1265 = vld [vmem:[#allocation2 + $0x1] sm:$0xff]
        %v1266 = vld [vmem:[#allocation2 + $0x9] sm:$0xff]
        %v1267 = vld [vmem:[#allocation2 + $0x19] sm:$0xff]
        %v1268 = vld [vmem:[#allocation2 + $0x21] sm:$0xff]
        %v1269 = vld [vmem:[#allocation2 + $0x31] sm:$0xff]
        %v1270 = vld [vmem:[#allocation2 + $0x39] sm:$0xff]
        %v1271 = vld [vmem:[#allocation2 + $0x49] sm:$0xff]
        %v1272 = vld [vmem:[#allocation2 + $0x51] sm:$0xff]
        %v1273 = vcombine.low %v1265, %v1269
        %v1274 = vcombine.high %v1265, %v1269
        %v1276 = vunpack.c.l.s4 1983009808
        %v1277 = vunpack.c.0.s8 %v1276
        %v1278 = vlaneseq
        %v1279 = vshrl.u32 %v1278, 7
        %v1280 = vsub.s32 %v1277, %v1279
        %v1281 = vrot.slane %v1273, %v1280
        %v1283 = vunpack.c.l.s4 1983009808
        %v1284 = vunpack.c.0.s8 %v1283
        %v1285 = vlaneseq
        %v1286 = vshrl.u32 %v1285, 7
        %v1287 = vsub.s32 %v1284, %v1286
        %v1288 = vrot.slane %v1274, %v1287
        %v1289 = vcombine.low %v1267, %v1271
        %v1290 = vcombine.high %v1267, %v1271
        %v1292 = vunpack.c.l.s4 1983009808
        %v1293 = vunpack.c.0.s8 %v1292
        %v1294 = vlaneseq
        %v1295 = vshrl.u32 %v1294, 7
        %v1296 = vsub.s32 %v1293, %v1295
        %v1297 = vrot.slane %v1289, %v1296
        %v1299 = vunpack.c.l.s4 1983009808
        %v1300 = vunpack.c.0.s8 %v1299
        %v1301 = vlaneseq
        %v1302 = vshrl.u32 %v1301, 7
        %v1303 = vsub.s32 %v1300, %v1302
        %v1304 = vrot.slane %v1290, %v1303
        %v1305 = vcombine.low %v1281, %v1297
        %v1306 = vcombine.high %v1281, %v1297
        %v1308 = vunpack.c.l.s4 1934713408
        %v1309 = vunpack.c.0.s8 %v1308
        %v1310 = vlaneseq
        %v1311 = vshrl.u32 %v1310, 7
        %v1312 = vsub.s32 %v1309, %v1311
        %v1313 = vrot.slane %v1305, %v1312
        %v1315 = vunpack.c.l.s4 1934713408
        %v1316 = vunpack.c.0.s8 %v1315
        %v1317 = vlaneseq
        %v1318 = vshrl.u32 %v1317, 7
        %v1319 = vsub.s32 %v1316, %v1318
        %v1320 = vrot.slane %v1306, %v1319
        %v1321 = vcombine.low %v1288, %v1304
        %v1322 = vcombine.high %v1288, %v1304
        %v1324 = vunpack.c.l.s4 1934713408
        %v1325 = vunpack.c.0.s8 %v1324
        %v1326 = vlaneseq
        %v1327 = vshrl.u32 %v1326, 7
        %v1328 = vsub.s32 %v1325, %v1327
        %v1329 = vrot.slane %v1321, %v1328
        %v1331 = vunpack.c.l.s4 1934713408
        %v1332 = vunpack.c.0.s8 %v1331
        %v1333 = vlaneseq
        %v1334 = vshrl.u32 %v1333, 7
        %v1335 = vsub.s32 %v1332, %v1334
        %v1336 = vrot.slane %v1322, %v1335
        %v1337 = vcombine.high %v1313, 0.0
        %v1338 = vcombine.high %v1320, 0.0
        %v1339 = vcombine.high %v1329, 0.0
        %v1340 = vcombine.high %v1336, 0.0
        %v1341 = vcombine.low %v1266, %v1270
        %v1342 = vcombine.high %v1266, %v1270
        %v1344 = vunpack.c.l.s4 1983009808
        %v1345 = vunpack.c.0.s8 %v1344
        %v1346 = vlaneseq
        %v1347 = vshrl.u32 %v1346, 7
        %v1348 = vsub.s32 %v1345, %v1347
        %v1349 = vrot.slane %v1341, %v1348
        %v1351 = vunpack.c.l.s4 1983009808
        %v1352 = vunpack.c.0.s8 %v1351
        %v1353 = vlaneseq
        %v1354 = vshrl.u32 %v1353, 7
        %v1355 = vsub.s32 %v1352, %v1354
        %v1356 = vrot.slane %v1342, %v1355
        %v1357 = vcombine.low %v1268, %v1272
        %v1358 = vcombine.high %v1268, %v1272
        %v1360 = vunpack.c.l.s4 1983009808
        %v1361 = vunpack.c.0.s8 %v1360
        %v1362 = vlaneseq
        %v1363 = vshrl.u32 %v1362, 7
        %v1364 = vsub.s32 %v1361, %v1363
        %v1365 = vrot.slane %v1357, %v1364
        %v1367 = vunpack.c.l.s4 1983009808
        %v1368 = vunpack.c.0.s8 %v1367
        %v1369 = vlaneseq
        %v1370 = vshrl.u32 %v1369, 7
        %v1371 = vsub.s32 %v1368, %v1370
        %v1372 = vrot.slane %v1358, %v1371
        %v1373 = vcombine.low %v1349, %v1365
        %v1374 = vcombine.high %v1349, %v1365
        %v1376 = vunpack.c.l.s4 1934713408
        %v1377 = vunpack.c.0.s8 %v1376
        %v1378 = vlaneseq
        %v1379 = vshrl.u32 %v1378, 7
        %v1380 = vsub.s32 %v1377, %v1379
        %v1381 = vrot.slane %v1373, %v1380
        %v1383 = vunpack.c.l.s4 1934713408
        %v1384 = vunpack.c.0.s8 %v1383
        %v1385 = vlaneseq
        %v1386 = vshrl.u32 %v1385, 7
        %v1387 = vsub.s32 %v1384, %v1386
        %v1388 = vrot.slane %v1374, %v1387
        %v1389 = vcombine.low %v1356, %v1372
        %v1390 = vcombine.high %v1356, %v1372
        %v1392 = vunpack.c.l.s4 1934713408
        %v1393 = vunpack.c.0.s8 %v1392
        %v1394 = vlaneseq
        %v1395 = vshrl.u32 %v1394, 7
        %v1396 = vsub.s32 %v1393, %v1395
        %v1397 = vrot.slane %v1389, %v1396
        %v1399 = vunpack.c.l.s4 1934713408
        %v1400 = vunpack.c.0.s8 %v1399
        %v1401 = vlaneseq
        %v1402 = vshrl.u32 %v1401, 7
        %v1403 = vsub.s32 %v1400, %v1402
        %v1404 = vrot.slane %v1390, %v1403
        %v1405 = vcombine.high %v1381, 0.0
        %v1406 = vcombine.high %v1388, 0.0
        %v1407 = vcombine.high %v1397, 0.0
        %v1408 = vcombine.high %v1404, 0.0
        %1410 = vrot.lane.b32.xlu0 %v1337, 16
        %v1411 = vpop.permute.xlu0 %1410
        %1414 = vrot.lane.b32.xlu0 %v1320, 32
        %v1415 = vpop.permute.xlu0 %1414
        %1418 = vrot.lane.b32.xlu0 %v1338, 48
        %v1419 = vpop.permute.xlu0 %1418
        %1422 = vrot.lane.b32.xlu0 %v1329, 64
        %v1423 = vpop.permute.xlu0 %1422
        %1426 = vrot.lane.b32.xlu0 %v1339, 80
        %v1427 = vpop.permute.xlu0 %1426
        %1430 = vrot.lane.b32.xlu0 %v1336, 96
        %v1431 = vpop.permute.xlu0 %1430
        %1434 = vrot.lane.b32.xlu0 %v1340, 112
        %v1435 = vpop.permute.xlu0 %1434
        %1438 = vrot.lane.b32.xlu0 %v1405, 16
        %v1439 = vpop.permute.xlu0 %1438
        %1442 = vrot.lane.b32.xlu0 %v1388, 32
        %v1443 = vpop.permute.xlu0 %1442
        %1446 = vrot.lane.b32.xlu0 %v1406, 48
        %v1447 = vpop.permute.xlu0 %1446
        %1450 = vrot.lane.b32.xlu0 %v1397, 64
        %v1451 = vpop.permute.xlu0 %1450
        %1454 = vrot.lane.b32.xlu0 %v1407, 80
        %v1455 = vpop.permute.xlu0 %1454
        %1458 = vrot.lane.b32.xlu0 %v1404, 96
        %v1459 = vpop.permute.xlu0 %1458
        %1462 = vrot.lane.b32.xlu0 %v1408, 112
        %v1463 = vpop.permute.xlu0 %1462
        %v1465 = vsel %vm481, %v1313, %v1411
        %v1466 = vsel %vm483, %v1465, %v1415
        %v1467 = vsel %vm485, %v1466, %v1419
        %v1468 = vsel %vm487, %v1467, %v1423
        %v1469 = vsel %vm489, %v1468, %v1427
        %v1470 = vsel %vm491, %v1469, %v1431
        %v1471 = vsel %vm493, %v1470, %v1435
        %v1472 = vsel %vm481, %v1381, %v1439
        %v1473 = vsel %vm483, %v1472, %v1443
        %v1474 = vsel %vm485, %v1473, %v1447
        %v1475 = vsel %vm487, %v1474, %v1451
        %v1476 = vsel %vm489, %v1475, %v1455
        %v1477 = vsel %vm491, %v1476, %v1459
        %v1478 = vsel %vm493, %v1477, %v1463
        %v1479 = vpack.c.bf16 %v1471, %v1471
        %v1480 = vpack.c.bf16 %v1478, %v1478
        %s1481 = scalar_lea.vmem %s1, 48
        %v1482 = vld [vmem:[%s1481] sm:$0xf]
        %v1483 = vld [vmem:[%s1481 + $0x4] sm:$0xf]
        %v1484 = vld [vmem:[%s1481 + $0x8] sm:$0xf]
        %v1485 = vld [vmem:[%s1481 + $0xc] sm:$0xf]
        %v1490 = vunpack.c.l.b16 %v1482
        %v1491 = vunpack.c.l.b16 %v1483
        %v1492 = vunpack.c.l.b16 %v1484
        %v1493 = vunpack.c.l.b16 %v1485
        %v1494 = vpack.c.b16 %v1491, %v1490
        %v1495 = vpack.c.b16 %v1493, %v1492
        %v1497 = vsel %vm518, %v1494, 0
        %v1500 = vsel %vm518, %v1495, 0
        %v1503 = vsel %vm525, %v1479, 0
        %v1506 = vsel %vm525, %v1480, 0
        %1508 = vmatprep.subr.bf16.mxu0 %v1506
        %1509 = vmatpush1.bf16.msra.mxu0 %v1503
        %1510 = vmatprep.subr.bf16.mxu0 0
        %1511 = vmatpush1.bf16.msra.mxu0 0
        %1512 = vmatprep.subr.bf16.mxu0 0
        %1513 = vmatpush1.bf16.msra.mxu0 0
        %1514 = vmatprep.subr.bf16.mxu0 0
        %1515 = vmatpush1.bf16.msra.mxu0 0
        %1516 = vmatprep.subr.bf16.mxu0 0
        %1517 = vmatpush1.bf16.msra.mxu0 0
        %1518 = vmatprep.subr.bf16.mxu0 0
        %1519 = vmatpush1.bf16.msra.mxu0 0
        %1520 = vmatprep.subr.bf16.mxu0 0
        %1521 = vmatpush1.bf16.msra.mxu0 0
        %1522 = vmatprep.subr.bf16.mxu0 0
        %1523 = vmatpush1.bf16.msra.mxu0 0
        %1524 = vmatprep.subr.bf16.mxu0 0
        %1525 = vmatpush1.bf16.msra.mxu0 0
        %1526 = vmatprep.subr.bf16.mxu0 0
        %1527 = vmatpush1.bf16.msra.mxu0 0
        %1528 = vmatprep.subr.bf16.mxu0 0
        %1529 = vmatpush1.bf16.msra.mxu0 0
        %1530 = vmatprep.subr.bf16.mxu0 0
        %1531 = vmatpush1.bf16.msra.mxu0 0
        %1532 = vmatprep.subr.bf16.mxu0 0
        %1533 = vmatpush1.bf16.msra.mxu0 0
        %1534 = vmatprep.subr.bf16.mxu0 0
        %1535 = vmatpush1.bf16.msra.mxu0 0
        %1536 = vmatprep.subr.bf16.mxu0 0
        %1537 = vmatpush1.bf16.msra.mxu0 0
        %1538 = vmatprep.subr.bf16.mxu0 0
        %1539 = vmatpush1.bf16.msra.mxu0 0
        %1540 = vmatprep.mubr.bf16.mxu0 0
        %1541 = vmatmul.mubr.bf16.gmra.mrb[0].mxu0 %v1497
        %v1542 = vpop.f32.mrb[0].mxu0
        %v1543 = vadd.f32 0.0, %v1542
        %v1544 = vpop.f32.mrb[0].mxu0
        %v1545 = vadd.f32 0.0, %v1544
        %v1546 = vpop.f32.mrb[0].mxu0
        %v1547 = vadd.f32 0.0, %v1546
        %v1548 = vpop.f32.mrb[0].mxu0
        %v1549 = vadd.f32 0.0, %v1548
        %1550 = vmatprep.mubr.bf16.mxu0 0
        %1551 = vmatmul.mubr.bf16.gmra.mrb[0].mxu0 %v1500
        %v1552 = vpop.f32.mrb[0].mxu0
        %v1553 = vadd.f32 0.0, %v1552
        %v1554 = vpop.f32.mrb[0].mxu0
        %v1555 = vadd.f32 0.0, %v1554
        %v1556 = vpop.f32.mrb[0].mxu0
        %v1557 = vadd.f32 0.0, %v1556
        %v1558 = vpop.f32.mrb[0].mxu0
        %v1559 = vadd.f32 0.0, %v1558
        %1560 = vdwg.mxu0
        %v1561 = vadd.f32 %v1257, %v1543
        %v1562 = vadd.f32 %v1258, %v1545
        %v1563 = vadd.f32 %v1259, %v1547
        %v1564 = vadd.f32 %v1260, %v1549
        %v1565 = vadd.f32 %v1261, %v1553
        %v1566 = vadd.f32 %v1262, %v1555
        %v1567 = vadd.f32 %v1263, %v1557
        %v1568 = vadd.f32 %v1264, %v1559
        %v1569 = vld [vmem:[#allocation2 + $0x1] sm:$0xff]
        %v1570 = vld [vmem:[#allocation2 + $0x9] sm:$0xff]
        %v1571 = vld [vmem:[#allocation2 + $0x19] sm:$0xff]
        %v1572 = vld [vmem:[#allocation2 + $0x21] sm:$0xff]
        %v1573 = vld [vmem:[#allocation2 + $0x31] sm:$0xff]
        %v1574 = vld [vmem:[#allocation2 + $0x39] sm:$0xff]
        %v1575 = vld [vmem:[#allocation2 + $0x49] sm:$0xff]
        %v1576 = vld [vmem:[#allocation2 + $0x51] sm:$0xff]
        %1585 = vrot.lane.b32.xlu0 %v1569, 127
        %v1586 = vpop.permute.xlu0 %1585
        %1587 = vrot.lane.b32.xlu0 %v1570, 127
        %v1588 = vpop.permute.xlu0 %1587
        %1589 = vrot.lane.b32.xlu0 %v1571, 127
        %v1590 = vpop.permute.xlu0 %1589
        %1591 = vrot.lane.b32.xlu0 %v1572, 127
        %v1592 = vpop.permute.xlu0 %1591
        %1593 = vrot.lane.b32.xlu0 %v1573, 127
        %v1594 = vpop.permute.xlu0 %1593
        %1595 = vrot.lane.b32.xlu0 %v1574, 127
        %v1596 = vpop.permute.xlu0 %1595
        %1597 = vrot.lane.b32.xlu0 %v1575, 127
        %v1598 = vpop.permute.xlu0 %1597
        %1599 = vrot.lane.b32.xlu0 %v1576, 127
        %v1600 = vpop.permute.xlu0 %1599
        %v1609 = vcombine.low %v1586, %v1594
        %v1610 = vcombine.high %v1586, %v1594
        %v1612 = vunpack.c.l.s4 1983009808
        %v1613 = vunpack.c.0.s8 %v1612
        %v1614 = vlaneseq
        %v1615 = vshrl.u32 %v1614, 7
        %v1616 = vsub.s32 %v1613, %v1615
        %v1617 = vrot.slane %v1609, %v1616
        %v1619 = vunpack.c.l.s4 1983009808
        %v1620 = vunpack.c.0.s8 %v1619
        %v1621 = vlaneseq
        %v1622 = vshrl.u32 %v1621, 7
        %v1623 = vsub.s32 %v1620, %v1622
        %v1624 = vrot.slane %v1610, %v1623
        %v1625 = vcombine.low %v1590, %v1598
        %v1626 = vcombine.high %v1590, %v1598
        %v1628 = vunpack.c.l.s4 1983009808
        %v1629 = vunpack.c.0.s8 %v1628
        %v1630 = vlaneseq
        %v1631 = vshrl.u32 %v1630, 7
        %v1632 = vsub.s32 %v1629, %v1631
        %v1633 = vrot.slane %v1625, %v1632
        %v1635 = vunpack.c.l.s4 1983009808
        %v1636 = vunpack.c.0.s8 %v1635
        %v1637 = vlaneseq
        %v1638 = vshrl.u32 %v1637, 7
        %v1639 = vsub.s32 %v1636, %v1638
        %v1640 = vrot.slane %v1626, %v1639
        %v1641 = vcombine.low %v1617, %v1633
        %v1642 = vcombine.high %v1617, %v1633
        %v1644 = vunpack.c.l.s4 1934713408
        %v1645 = vunpack.c.0.s8 %v1644
        %v1646 = vlaneseq
        %v1647 = vshrl.u32 %v1646, 7
        %v1648 = vsub.s32 %v1645, %v1647
        %v1649 = vrot.slane %v1641, %v1648
        %v1651 = vunpack.c.l.s4 1934713408
        %v1652 = vunpack.c.0.s8 %v1651
        %v1653 = vlaneseq
        %v1654 = vshrl.u32 %v1653, 7
        %v1655 = vsub.s32 %v1652, %v1654
        %v1656 = vrot.slane %v1642, %v1655
        %v1657 = vcombine.low %v1624, %v1640
        %v1658 = vcombine.high %v1624, %v1640
        %v1660 = vunpack.c.l.s4 1934713408
        %v1661 = vunpack.c.0.s8 %v1660
        %v1662 = vlaneseq
        %v1663 = vshrl.u32 %v1662, 7
        %v1664 = vsub.s32 %v1661, %v1663
        %v1665 = vrot.slane %v1657, %v1664
        %v1667 = vunpack.c.l.s4 1934713408
        %v1668 = vunpack.c.0.s8 %v1667
        %v1669 = vlaneseq
        %v1670 = vshrl.u32 %v1669, 7
        %v1671 = vsub.s32 %v1668, %v1670
        %v1672 = vrot.slane %v1658, %v1671
        %v1673 = vcombine.high %v1649, 0.0
        %v1674 = vcombine.high %v1656, 0.0
        %v1675 = vcombine.high %v1665, 0.0
        %v1676 = vcombine.high %v1672, 0.0
        %v1677 = vcombine.low %v1588, %v1596
        %v1678 = vcombine.high %v1588, %v1596
        %v1680 = vunpack.c.l.s4 1983009808
        %v1681 = vunpack.c.0.s8 %v1680
        %v1682 = vlaneseq
        %v1683 = vshrl.u32 %v1682, 7
        %v1684 = vsub.s32 %v1681, %v1683
        %v1685 = vrot.slane %v1677, %v1684
        %v1687 = vunpack.c.l.s4 1983009808
        %v1688 = vunpack.c.0.s8 %v1687
        %v1689 = vlaneseq
        %v1690 = vshrl.u32 %v1689, 7
        %v1691 = vsub.s32 %v1688, %v1690
        %v1692 = vrot.slane %v1678, %v1691
        %v1693 = vcombine.low %v1592, %v1600
        %v1694 = vcombine.high %v1592, %v1600
        %v1696 = vunpack.c.l.s4 1983009808
        %v1697 = vunpack.c.0.s8 %v1696
        %v1698 = vlaneseq
        %v1699 = vshrl.u32 %v1698, 7
        %v1700 = vsub.s32 %v1697, %v1699
        %v1701 = vrot.slane %v1693, %v1700
        %v1703 = vunpack.c.l.s4 1983009808
        %v1704 = vunpack.c.0.s8 %v1703
        %v1705 = vlaneseq
        %v1706 = vshrl.u32 %v1705, 7
        %v1707 = vsub.s32 %v1704, %v1706
        %v1708 = vrot.slane %v1694, %v1707
        %v1709 = vcombine.low %v1685, %v1701
        %v1710 = vcombine.high %v1685, %v1701
        %v1712 = vunpack.c.l.s4 1934713408
        %v1713 = vunpack.c.0.s8 %v1712
        %v1714 = vlaneseq
        %v1715 = vshrl.u32 %v1714, 7
        %v1716 = vsub.s32 %v1713, %v1715
        %v1717 = vrot.slane %v1709, %v1716
        %v1719 = vunpack.c.l.s4 1934713408
        %v1720 = vunpack.c.0.s8 %v1719
        %v1721 = vlaneseq
        %v1722 = vshrl.u32 %v1721, 7
        %v1723 = vsub.s32 %v1720, %v1722
        %v1724 = vrot.slane %v1710, %v1723
        %v1725 = vcombine.low %v1692, %v1708
        %v1726 = vcombine.high %v1692, %v1708
        %v1728 = vunpack.c.l.s4 1934713408
        %v1729 = vunpack.c.0.s8 %v1728
        %v1730 = vlaneseq
        %v1731 = vshrl.u32 %v1730, 7
        %v1732 = vsub.s32 %v1729, %v1731
        %v1733 = vrot.slane %v1725, %v1732
        %v1735 = vunpack.c.l.s4 1934713408
        %v1736 = vunpack.c.0.s8 %v1735
        %v1737 = vlaneseq
        %v1738 = vshrl.u32 %v1737, 7
        %v1739 = vsub.s32 %v1736, %v1738
        %v1740 = vrot.slane %v1726, %v1739
        %v1741 = vcombine.high %v1717, 0.0
        %v1742 = vcombine.high %v1724, 0.0
        %v1743 = vcombine.high %v1733, 0.0
        %v1744 = vcombine.high %v1740, 0.0
        %1746 = vrot.lane.b32.xlu0 %v1673, 16
        %v1747 = vpop.permute.xlu0 %1746
        %1750 = vrot.lane.b32.xlu0 %v1656, 32
        %v1751 = vpop.permute.xlu0 %1750
        %1754 = vrot.lane.b32.xlu0 %v1674, 48
        %v1755 = vpop.permute.xlu0 %1754
        %1758 = vrot.lane.b32.xlu0 %v1665, 64
        %v1759 = vpop.permute.xlu0 %1758
        %1762 = vrot.lane.b32.xlu0 %v1675, 80
        %v1763 = vpop.permute.xlu0 %1762
        %1766 = vrot.lane.b32.xlu0 %v1672, 96
        %v1767 = vpop.permute.xlu0 %1766
        %1770 = vrot.lane.b32.xlu0 %v1676, 112
        %v1771 = vpop.permute.xlu0 %1770
        %1774 = vrot.lane.b32.xlu0 %v1741, 16
        %v1775 = vpop.permute.xlu0 %1774
        %1778 = vrot.lane.b32.xlu0 %v1724, 32
        %v1779 = vpop.permute.xlu0 %1778
        %1782 = vrot.lane.b32.xlu0 %v1742, 48
        %v1783 = vpop.permute.xlu0 %1782
        %1786 = vrot.lane.b32.xlu0 %v1733, 64
        %v1787 = vpop.permute.xlu0 %1786
        %1790 = vrot.lane.b32.xlu0 %v1743, 80
        %v1791 = vpop.permute.xlu0 %1790
        %1794 = vrot.lane.b32.xlu0 %v1740, 96
        %v1795 = vpop.permute.xlu0 %1794
        %1798 = vrot.lane.b32.xlu0 %v1744, 112
        %v1799 = vpop.permute.xlu0 %1798
        %v1801 = vsel %vm481, %v1649, %v1747
        %v1802 = vsel %vm483, %v1801, %v1751
        %v1803 = vsel %vm485, %v1802, %v1755
        %v1804 = vsel %vm487, %v1803, %v1759
        %v1805 = vsel %vm489, %v1804, %v1763
        %v1806 = vsel %vm491, %v1805, %v1767
        %v1807 = vsel %vm493, %v1806, %v1771
        %v1808 = vsel %vm481, %v1717, %v1775
        %v1809 = vsel %vm483, %v1808, %v1779
        %v1810 = vsel %vm485, %v1809, %v1783
        %v1811 = vsel %vm487, %v1810, %v1787
        %v1812 = vsel %vm489, %v1811, %v1791
        %v1813 = vsel %vm491, %v1812, %v1795
        %v1814 = vsel %vm493, %v1813, %v1799
        %v1815 = vpack.c.bf16 %v1807, %v1807
        %v1816 = vpack.c.bf16 %v1814, %v1814
        %s1817 = scalar_lea.vmem %s1, 64
        %v1818 = vld [vmem:[%s1817] sm:$0xf]
        %v1819 = vld [vmem:[%s1817 + $0x4] sm:$0xf]
        %v1820 = vld [vmem:[%s1817 + $0x8] sm:$0xf]
        %v1821 = vld [vmem:[%s1817 + $0xc] sm:$0xf]
        %v1826 = vunpack.c.l.b16 %v1818
        %v1827 = vunpack.c.l.b16 %v1819
        %v1828 = vunpack.c.l.b16 %v1820
        %v1829 = vunpack.c.l.b16 %v1821
        %v1830 = vpack.c.b16 %v1827, %v1826
        %v1831 = vpack.c.b16 %v1829, %v1828
        %v1833 = vsel %vm518, %v1830, 0
        %v1836 = vsel %vm518, %v1831, 0
        %v1839 = vsel %vm525, %v1815, 0
        %v1842 = vsel %vm525, %v1816, 0
        %1844 = vmatprep.subr.bf16.mxu0 %v1842
        %1845 = vmatpush1.bf16.msra.mxu0 %v1839
        %1846 = vmatprep.subr.bf16.mxu0 0
        %1847 = vmatpush1.bf16.msra.mxu0 0
        %1848 = vmatprep.subr.bf16.mxu0 0
        %1849 = vmatpush1.bf16.msra.mxu0 0
        %1850 = vmatprep.subr.bf16.mxu0 0
        %1851 = vmatpush1.bf16.msra.mxu0 0
        %1852 = vmatprep.subr.bf16.mxu0 0
        %1853 = vmatpush1.bf16.msra.mxu0 0
        %1854 = vmatprep.subr.bf16.mxu0 0
        %1855 = vmatpush1.bf16.msra.mxu0 0
        %1856 = vmatprep.subr.bf16.mxu0 0
        %1857 = vmatpush1.bf16.msra.mxu0 0
        %1858 = vmatprep.subr.bf16.mxu0 0
        %1859 = vmatpush1.bf16.msra.mxu0 0
        %1860 = vmatprep.subr.bf16.mxu0 0
        %1861 = vmatpush1.bf16.msra.mxu0 0
        %1862 = vmatprep.subr.bf16.mxu0 0
        %1863 = vmatpush1.bf16.msra.mxu0 0
        %1864 = vmatprep.subr.bf16.mxu0 0
        %1865 = vmatpush1.bf16.msra.mxu0 0
        %1866 = vmatprep.subr.bf16.mxu0 0
        %1867 = vmatpush1.bf16.msra.mxu0 0
        %1868 = vmatprep.subr.bf16.mxu0 0
        %1869 = vmatpush1.bf16.msra.mxu0 0
        %1870 = vmatprep.subr.bf16.mxu0 0
        %1871 = vmatpush1.bf16.msra.mxu0 0
        %1872 = vmatprep.subr.bf16.mxu0 0
        %1873 = vmatpush1.bf16.msra.mxu0 0
        %1874 = vmatprep.subr.bf16.mxu0 0
        %1875 = vmatpush1.bf16.msra.mxu0 0
        %1876 = vmatprep.mubr.bf16.mxu0 0
        %1877 = vmatmul.mubr.bf16.gmra.mrb[0].mxu0 %v1833
        %v1878 = vpop.f32.mrb[0].mxu0
        %v1879 = vadd.f32 0.0, %v1878
        %v1880 = vpop.f32.mrb[0].mxu0
        %v1881 = vadd.f32 0.0, %v1880
        %v1882 = vpop.f32.mrb[0].mxu0
        %v1883 = vadd.f32 0.0, %v1882
        %v1884 = vpop.f32.mrb[0].mxu0
        %v1885 = vadd.f32 0.0, %v1884
        %1886 = vmatprep.mubr.bf16.mxu0 0
        %1887 = vmatmul.mubr.bf16.gmra.mrb[0].mxu0 %v1836
        %v1888 = vpop.f32.mrb[0].mxu0
        %v1889 = vadd.f32 0.0, %v1888
        %v1890 = vpop.f32.mrb[0].mxu0
        %v1891 = vadd.f32 0.0, %v1890
        %v1892 = vpop.f32.mrb[0].mxu0
        %v1893 = vadd.f32 0.0, %v1892
        %v1894 = vpop.f32.mrb[0].mxu0
        %v1895 = vadd.f32 0.0, %v1894
        %1896 = vdwg.mxu0
        %v1897 = vadd.f32 %v1561, %v1879
        %v1898 = vadd.f32 %v1562, %v1881
        %v1899 = vadd.f32 %v1563, %v1883
        %v1900 = vadd.f32 %v1564, %v1885
        %v1901 = vadd.f32 %v1565, %v1889
        %v1902 = vadd.f32 %v1566, %v1891
        %v1903 = vadd.f32 %v1567, %v1893
        %v1904 = vadd.f32 %v1568, %v1895
        %v1905 = vld [vmem:[#allocation2 + $0x1] sm:$0xff]
        %v1906 = vld [vmem:[#allocation2 + $0x9] sm:$0xff]
        %v1907 = vld [vmem:[#allocation2 + $0x19] sm:$0xff]
        %v1908 = vld [vmem:[#allocation2 + $0x21] sm:$0xff]
        %v1909 = vld [vmem:[#allocation2 + $0x31] sm:$0xff]
        %v1910 = vld [vmem:[#allocation2 + $0x39] sm:$0xff]
        %v1911 = vld [vmem:[#allocation2 + $0x49] sm:$0xff]
        %v1912 = vld [vmem:[#allocation2 + $0x51] sm:$0xff]
        %1921 = vrot.lane.b32.xlu0 %v1905, 126
        %v1922 = vpop.permute.xlu0 %1921
        %1923 = vrot.lane.b32.xlu0 %v1906, 126
        %v1924 = vpop.permute.xlu0 %1923
        %1925 = vrot.lane.b32.xlu0 %v1907, 126
        %v1926 = vpop.permute.xlu0 %1925
        %1927 = vrot.lane.b32.xlu0 %v1908, 126
        %v1928 = vpop.permute.xlu0 %1927
        %1929 = vrot.lane.b32.xlu0 %v1909, 126
        %v1930 = vpop.permute.xlu0 %1929
        %1931 = vrot.lane.b32.xlu0 %v1910, 126
        %v1932 = vpop.permute.xlu0 %1931
        %1933 = vrot.lane.b32.xlu0 %v1911, 126
        %v1934 = vpop.permute.xlu0 %1933
        %1935 = vrot.lane.b32.xlu0 %v1912, 126
        %v1936 = vpop.permute.xlu0 %1935
        %v1945 = vcombine.low %v1922, %v1930
        %v1946 = vcombine.high %v1922, %v1930
        %v1948 = vunpack.c.l.s4 1983009808
        %v1949 = vunpack.c.0.s8 %v1948
        %v1950 = vlaneseq
        %v1951 = vshrl.u32 %v1950, 7
        %v1952 = vsub.s32 %v1949, %v1951
        %v1953 = vrot.slane %v1945, %v1952
        %v1955 = vunpack.c.l.s4 1983009808
        %v1956 = vunpack.c.0.s8 %v1955
        %v1957 = vlaneseq
        %v1958 = vshrl.u32 %v1957, 7
        %v1959 = vsub.s32 %v1956, %v1958
        %v1960 = vrot.slane %v1946, %v1959
        %v1961 = vcombine.low %v1926, %v1934
        %v1962 = vcombine.high %v1926, %v1934
        %v1964 = vunpack.c.l.s4 1983009808
        %v1965 = vunpack.c.0.s8 %v1964
        %v1966 = vlaneseq
        %v1967 = vshrl.u32 %v1966, 7
        %v1968 = vsub.s32 %v1965, %v1967
        %v1969 = vrot.slane %v1961, %v1968
        %v1971 = vunpack.c.l.s4 1983009808
        %v1972 = vunpack.c.0.s8 %v1971
        %v1973 = vlaneseq
        %v1974 = vshrl.u32 %v1973, 7
        %v1975 = vsub.s32 %v1972, %v1974
        %v1976 = vrot.slane %v1962, %v1975
        %v1977 = vcombine.low %v1953, %v1969
        %v1978 = vcombine.high %v1953, %v1969
        %v1980 = vunpack.c.l.s4 1934713408
        %v1981 = vunpack.c.0.s8 %v1980
        %v1982 = vlaneseq
        %v1983 = vshrl.u32 %v1982, 7
        %v1984 = vsub.s32 %v1981, %v1983
        %v1985 = vrot.slane %v1977, %v1984
        %v1987 = vunpack.c.l.s4 1934713408
        %v1988 = vunpack.c.0.s8 %v1987
        %v1989 = vlaneseq
        %v1990 = vshrl.u32 %v1989, 7
        %v1991 = vsub.s32 %v1988, %v1990
        %v1992 = vrot.slane %v1978, %v1991
        %v1993 = vcombine.low %v1960, %v1976
        %v1994 = vcombine.high %v1960, %v1976
        %v1996 = vunpack.c.l.s4 1934713408
        %v1997 = vunpack.c.0.s8 %v1996
        %v1998 = vlaneseq
        %v1999 = vshrl.u32 %v1998, 7
        %v2000 = vsub.s32 %v1997, %v1999
        %v2001 = vrot.slane %v1993, %v2000
        %v2003 = vunpack.c.l.s4 1934713408
        %v2004 = vunpack.c.0.s8 %v2003
        %v2005 = vlaneseq
        %v2006 = vshrl.u32 %v2005, 7
        %v2007 = vsub.s32 %v2004, %v2006
        %v2008 = vrot.slane %v1994, %v2007
        %v2009 = vcombine.high %v1985, 0.0
        %v2010 = vcombine.high %v1992, 0.0
        %v2011 = vcombine.high %v2001, 0.0
        %v2012 = vcombine.high %v2008, 0.0
        %v2013 = vcombine.low %v1924, %v1932
        %v2014 = vcombine.high %v1924, %v1932
        %v2016 = vunpack.c.l.s4 1983009808
        %v2017 = vunpack.c.0.s8 %v2016
        %v2018 = vlaneseq
        %v2019 = vshrl.u32 %v2018, 7
        %v2020 = vsub.s32 %v2017, %v2019
        %v2021 = vrot.slane %v2013, %v2020
        %v2023 = vunpack.c.l.s4 1983009808
        %v2024 = vunpack.c.0.s8 %v2023
        %v2025 = vlaneseq
        %v2026 = vshrl.u32 %v2025, 7
        %v2027 = vsub.s32 %v2024, %v2026
        %v2028 = vrot.slane %v2014, %v2027
        %v2029 = vcombine.low %v1928, %v1936
        %v2030 = vcombine.high %v1928, %v1936
        %v2032 = vunpack.c.l.s4 1983009808
        %v2033 = vunpack.c.0.s8 %v2032
        %v2034 = vlaneseq
        %v2035 = vshrl.u32 %v2034, 7
        %v2036 = vsub.s32 %v2033, %v2035
        %v2037 = vrot.slane %v2029, %v2036
        %v2039 = vunpack.c.l.s4 1983009808
        %v2040 = vunpack.c.0.s8 %v2039
        %v2041 = vlaneseq
        %v2042 = vshrl.u32 %v2041, 7
        %v2043 = vsub.s32 %v2040, %v2042
        %v2044 = vrot.slane %v2030, %v2043
        %v2045 = vcombine.low %v2021, %v2037
        %v2046 = vcombine.high %v2021, %v2037
        %v2048 = vunpack.c.l.s4 1934713408
        %v2049 = vunpack.c.0.s8 %v2048
        %v2050 = vlaneseq
        %v2051 = vshrl.u32 %v2050, 7
        %v2052 = vsub.s32 %v2049, %v2051
        %v2053 = vrot.slane %v2045, %v2052
        %v2055 = vunpack.c.l.s4 1934713408
        %v2056 = vunpack.c.0.s8 %v2055
        %v2057 = vlaneseq
        %v2058 = vshrl.u32 %v2057, 7
        %v2059 = vsub.s32 %v2056, %v2058
        %v2060 = vrot.slane %v2046, %v2059
        %v2061 = vcombine.low %v2028, %v2044
        %v2062 = vcombine.high %v2028, %v2044
        %v2064 = vunpack.c.l.s4 1934713408
        %v2065 = vunpack.c.0.s8 %v2064
        %v2066 = vlaneseq
        %v2067 = vshrl.u32 %v2066, 7
        %v2068 = vsub.s32 %v2065, %v2067
        %v2069 = vrot.slane %v2061, %v2068
        %v2071 = vunpack.c.l.s4 1934713408
        %v2072 = vunpack.c.0.s8 %v2071
        %v2073 = vlaneseq
        %v2074 = vshrl.u32 %v2073, 7
        %v2075 = vsub.s32 %v2072, %v2074
        %v2076 = vrot.slane %v2062, %v2075
        %v2077 = vcombine.high %v2053, 0.0
        %v2078 = vcombine.high %v2060, 0.0
        %v2079 = vcombine.high %v2069, 0.0
        %v2080 = vcombine.high %v2076, 0.0
        %2082 = vrot.lane.b32.xlu0 %v2009, 16
        %v2083 = vpop.permute.xlu0 %2082
        %2086 = vrot.lane.b32.xlu0 %v1992, 32
        %v2087 = vpop.permute.xlu0 %2086
        %2090 = vrot.lane.b32.xlu0 %v2010, 48
        %v2091 = vpop.permute.xlu0 %2090
        %2094 = vrot.lane.b32.xlu0 %v2001, 64
        %v2095 = vpop.permute.xlu0 %2094
        %2098 = vrot.lane.b32.xlu0 %v2011, 80
        %v2099 = vpop.permute.xlu0 %2098
        %2102 = vrot.lane.b32.xlu0 %v2008, 96
        %v2103 = vpop.permute.xlu0 %2102
        %2106 = vrot.lane.b32.xlu0 %v2012, 112
        %v2107 = vpop.permute.xlu0 %2106
        %2110 = vrot.lane.b32.xlu0 %v2077, 16
        %v2111 = vpop.permute.xlu0 %2110
        %2114 = vrot.lane.b32.xlu0 %v2060, 32
        %v2115 = vpop.permute.xlu0 %2114
        %2118 = vrot.lane.b32.xlu0 %v2078, 48
        %v2119 = vpop.permute.xlu0 %2118
        %2122 = vrot.lane.b32.xlu0 %v2069, 64
        %v2123 = vpop.permute.xlu0 %2122
        %2126 = vrot.lane.b32.xlu0 %v2079, 80
        %v2127 = vpop.permute.xlu0 %2126
        %2130 = vrot.lane.b32.xlu0 %v2076, 96
        %v2131 = vpop.permute.xlu0 %2130
        %2134 = vrot.lane.b32.xlu0 %v2080, 112
        %v2135 = vpop.permute.xlu0 %2134
        %v2137 = vsel %vm481, %v1985, %v2083
        %v2138 = vsel %vm483, %v2137, %v2087
        %v2139 = vsel %vm485, %v2138, %v2091
        %v2140 = vsel %vm487, %v2139, %v2095
        %v2141 = vsel %vm489, %v2140, %v2099
        %v2142 = vsel %vm491, %v2141, %v2103
        %v2143 = vsel %vm493, %v2142, %v2107
        %v2144 = vsel %vm481, %v2053, %v2111
        %v2145 = vsel %vm483, %v2144, %v2115
        %v2146 = vsel %vm485, %v2145, %v2119
        %v2147 = vsel %vm487, %v2146, %v2123
        %v2148 = vsel %vm489, %v2147, %v2127
        %v2149 = vsel %vm491, %v2148, %v2131
        %v2150 = vsel %vm493, %v2149, %v2135
        %v2151 = vpack.c.bf16 %v2143, %v2143
        %v2152 = vpack.c.bf16 %v2150, %v2150
        %s2153 = scalar_lea.vmem %s1, 80
        %v2154 = vld [vmem:[%s2153] sm:$0xf]
        %v2155 = vld [vmem:[%s2153 + $0x4] sm:$0xf]
        %v2156 = vld [vmem:[%s2153 + $0x8] sm:$0xf]
        %v2157 = vld [vmem:[%s2153 + $0xc] sm:$0xf]
        %v2162 = vunpack.c.l.b16 %v2154
        %v2163 = vunpack.c.l.b16 %v2155
        %v2164 = vunpack.c.l.b16 %v2156
        %v2165 = vunpack.c.l.b16 %v2157
        %v2166 = vpack.c.b16 %v2163, %v2162
        %v2167 = vpack.c.b16 %v2165, %v2164
        %v2169 = vsel %vm518, %v2166, 0
        %v2172 = vsel %vm518, %v2167, 0
        %v2175 = vsel %vm525, %v2151, 0
        %v2178 = vsel %vm525, %v2152, 0
        %2180 = vmatprep.subr.bf16.mxu0 %v2178
        %2181 = vmatpush1.bf16.msra.mxu0 %v2175
        %2182 = vmatprep.subr.bf16.mxu0 0
        %2183 = vmatpush1.bf16.msra.mxu0 0
        %2184 = vmatprep.subr.bf16.mxu0 0
        %2185 = vmatpush1.bf16.msra.mxu0 0
        %2186 = vmatprep.subr.bf16.mxu0 0
        %2187 = vmatpush1.bf16.msra.mxu0 0
        %2188 = vmatprep.subr.bf16.mxu0 0
        %2189 = vmatpush1.bf16.msra.mxu0 0
        %2190 = vmatprep.subr.bf16.mxu0 0
        %2191 = vmatpush1.bf16.msra.mxu0 0
        %2192 = vmatprep.subr.bf16.mxu0 0
        %2193 = vmatpush1.bf16.msra.mxu0 0
        %2194 = vmatprep.subr.bf16.mxu0 0
        %2195 = vmatpush1.bf16.msra.mxu0 0
        %2196 = vmatprep.subr.bf16.mxu0 0
        %2197 = vmatpush1.bf16.msra.mxu0 0
        %2198 = vmatprep.subr.bf16.mxu0 0
        %2199 = vmatpush1.bf16.msra.mxu0 0
        %2200 = vmatprep.subr.bf16.mxu0 0
        %2201 = vmatpush1.bf16.msra.mxu0 0
        %2202 = vmatprep.subr.bf16.mxu0 0
        %2203 = vmatpush1.bf16.msra.mxu0 0
        %2204 = vmatprep.subr.bf16.mxu0 0
        %2205 = vmatpush1.bf16.msra.mxu0 0
        %2206 = vmatprep.subr.bf16.mxu0 0
        %2207 = vmatpush1.bf16.msra.mxu0 0
        %2208 = vmatprep.subr.bf16.mxu0 0
        %2209 = vmatpush1.bf16.msra.mxu0 0
        %2210 = vmatprep.subr.bf16.mxu0 0
        %2211 = vmatpush1.bf16.msra.mxu0 0
        %2212 = vmatprep.mubr.bf16.mxu0 0
        %2213 = vmatmul.mubr.bf16.gmra.mrb[0].mxu0 %v2169
        %v2214 = vpop.f32.mrb[0].mxu0
        %v2215 = vadd.f32 0.0, %v2214
        %v2216 = vpop.f32.mrb[0].mxu0
        %v2217 = vadd.f32 0.0, %v2216
        %v2218 = vpop.f32.mrb[0].mxu0
        %v2219 = vadd.f32 0.0, %v2218
        %v2220 = vpop.f32.mrb[0].mxu0
        %v2221 = vadd.f32 0.0, %v2220
        %2222 = vmatprep.mubr.bf16.mxu0 0
        %2223 = vmatmul.mubr.bf16.gmra.mrb[0].mxu0 %v2172
        %v2224 = vpop.f32.mrb[0].mxu0
        %v2225 = vadd.f32 0.0, %v2224
        %v2226 = vpop.f32.mrb[0].mxu0
        %v2227 = vadd.f32 0.0, %v2226
        %v2228 = vpop.f32.mrb[0].mxu0
        %v2229 = vadd.f32 0.0, %v2228
        %v2230 = vpop.f32.mrb[0].mxu0
        %v2231 = vadd.f32 0.0, %v2230
        %2232 = vdwg.mxu0
        %v2233 = vadd.f32 %v1897, %v2215
        %v2234 = vadd.f32 %v1898, %v2217
        %v2235 = vadd.f32 %v1899, %v2219
        %v2236 = vadd.f32 %v1900, %v2221
        %v2237 = vadd.f32 %v1901, %v2225
        %v2238 = vadd.f32 %v1902, %v2227
        %v2239 = vadd.f32 %v1903, %v2229
        %v2240 = vadd.f32 %v1904, %v2231
        %v2241 = vld [vmem:[#allocation2 + $0x2] sm:$0xff]
        %v2242 = vld [vmem:[#allocation2 + $0xa] sm:$0xff]
        %v2243 = vld [vmem:[#allocation2 + $0x1a] sm:$0xff]
        %v2244 = vld [vmem:[#allocation2 + $0x22] sm:$0xff]
        %v2245 = vld [vmem:[#allocation2 + $0x32] sm:$0xff]
        %v2246 = vld [vmem:[#allocation2 + $0x3a] sm:$0xff]
        %v2247 = vld [vmem:[#allocation2 + $0x4a] sm:$0xff]
        %v2248 = vld [vmem:[#allocation2 + $0x52] sm:$0xff]
        %v2249 = vcombine.low %v2241, %v2245
        %v2250 = vcombine.high %v2241, %v2245
        %v2252 = vunpack.c.l.s4 1983009808
        %v2253 = vunpack.c.0.s8 %v2252
        %v2254 = vlaneseq
        %v2255 = vshrl.u32 %v2254, 7
        %v2256 = vsub.s32 %v2253, %v2255
        %v2257 = vrot.slane %v2249, %v2256
        %v2259 = vunpack.c.l.s4 1983009808
        %v2260 = vunpack.c.0.s8 %v2259
        %v2261 = vlaneseq
        %v2262 = vshrl.u32 %v2261, 7
        %v2263 = vsub.s32 %v2260, %v2262
        %v2264 = vrot.slane %v2250, %v2263
        %v2265 = vcombine.low %v2243, %v2247
        %v2266 = vcombine.high %v2243, %v2247
        %v2268 = vunpack.c.l.s4 1983009808
        %v2269 = vunpack.c.0.s8 %v2268
        %v2270 = vlaneseq
        %v2271 = vshrl.u32 %v2270, 7
        %v2272 = vsub.s32 %v2269, %v2271
        %v2273 = vrot.slane %v2265, %v2272
        %v2275 = vunpack.c.l.s4 1983009808
        %v2276 = vunpack.c.0.s8 %v2275
        %v2277 = vlaneseq
        %v2278 = vshrl.u32 %v2277, 7
        %v2279 = vsub.s32 %v2276, %v2278
        %v2280 = vrot.slane %v2266, %v2279
        %v2281 = vcombine.low %v2257, %v2273
        %v2282 = vcombine.high %v2257, %v2273
        %v2284 = vunpack.c.l.s4 1934713408
        %v2285 = vunpack.c.0.s8 %v2284
        %v2286 = vlaneseq
        %v2287 = vshrl.u32 %v2286, 7
        %v2288 = vsub.s32 %v2285, %v2287
        %v2289 = vrot.slane %v2281, %v2288
        %v2291 = vunpack.c.l.s4 1934713408
        %v2292 = vunpack.c.0.s8 %v2291
        %v2293 = vlaneseq
        %v2294 = vshrl.u32 %v2293, 7
        %v2295 = vsub.s32 %v2292, %v2294
        %v2296 = vrot.slane %v2282, %v2295
        %v2297 = vcombine.low %v2264, %v2280
        %v2298 = vcombine.high %v2264, %v2280
        %v2300 = vunpack.c.l.s4 1934713408
        %v2301 = vunpack.c.0.s8 %v2300
        %v2302 = vlaneseq
        %v2303 = vshrl.u32 %v2302, 7
        %v2304 = vsub.s32 %v2301, %v2303
        %v2305 = vrot.slane %v2297, %v2304
        %v2307 = vunpack.c.l.s4 1934713408
        %v2308 = vunpack.c.0.s8 %v2307
        %v2309 = vlaneseq
        %v2310 = vshrl.u32 %v2309, 7
        %v2311 = vsub.s32 %v2308, %v2310
        %v2312 = vrot.slane %v2298, %v2311
        %v2313 = vcombine.high %v2289, 0.0
        %v2314 = vcombine.high %v2296, 0.0
        %v2315 = vcombine.high %v2305, 0.0
        %v2316 = vcombine.high %v2312, 0.0
        %v2317 = vcombine.low %v2242, %v2246
        %v2318 = vcombine.high %v2242, %v2246
        %v2320 = vunpack.c.l.s4 1983009808
        %v2321 = vunpack.c.0.s8 %v2320
        %v2322 = vlaneseq
        %v2323 = vshrl.u32 %v2322, 7
        %v2324 = vsub.s32 %v2321, %v2323
        %v2325 = vrot.slane %v2317, %v2324
        %v2327 = vunpack.c.l.s4 1983009808
        %v2328 = vunpack.c.0.s8 %v2327
        %v2329 = vlaneseq
        %v2330 = vshrl.u32 %v2329, 7
        %v2331 = vsub.s32 %v2328, %v2330
        %v2332 = vrot.slane %v2318, %v2331
        %v2333 = vcombine.low %v2244, %v2248
        %v2334 = vcombine.high %v2244, %v2248
        %v2336 = vunpack.c.l.s4 1983009808
        %v2337 = vunpack.c.0.s8 %v2336
        %v2338 = vlaneseq
        %v2339 = vshrl.u32 %v2338, 7
        %v2340 = vsub.s32 %v2337, %v2339
        %v2341 = vrot.slane %v2333, %v2340
        %v2343 = vunpack.c.l.s4 1983009808
        %v2344 = vunpack.c.0.s8 %v2343
        %v2345 = vlaneseq
        %v2346 = vshrl.u32 %v2345, 7
        %v2347 = vsub.s32 %v2344, %v2346
        %v2348 = vrot.slane %v2334, %v2347
        %v2349 = vcombine.low %v2325, %v2341
        %v2350 = vcombine.high %v2325, %v2341
        %v2352 = vunpack.c.l.s4 1934713408
        %v2353 = vunpack.c.0.s8 %v2352
        %v2354 = vlaneseq
        %v2355 = vshrl.u32 %v2354, 7
        %v2356 = vsub.s32 %v2353, %v2355
        %v2357 = vrot.slane %v2349, %v2356
        %v2359 = vunpack.c.l.s4 1934713408
        %v2360 = vunpack.c.0.s8 %v2359
        %v2361 = vlaneseq
        %v2362 = vshrl.u32 %v2361, 7
        %v2363 = vsub.s32 %v2360, %v2362
        %v2364 = vrot.slane %v2350, %v2363
        %v2365 = vcombine.low %v2332, %v2348
        %v2366 = vcombine.high %v2332, %v2348
        %v2368 = vunpack.c.l.s4 1934713408
        %v2369 = vunpack.c.0.s8 %v2368
        %v2370 = vlaneseq
        %v2371 = vshrl.u32 %v2370, 7
        %v2372 = vsub.s32 %v2369, %v2371
        %v2373 = vrot.slane %v2365, %v2372
        %v2375 = vunpack.c.l.s4 1934713408
        %v2376 = vunpack.c.0.s8 %v2375
        %v2377 = vlaneseq
        %v2378 = vshrl.u32 %v2377, 7
        %v2379 = vsub.s32 %v2376, %v2378
        %v2380 = vrot.slane %v2366, %v2379
        %v2381 = vcombine.high %v2357, 0.0
        %v2382 = vcombine.high %v2364, 0.0
        %v2383 = vcombine.high %v2373, 0.0
        %v2384 = vcombine.high %v2380, 0.0
        %2386 = vrot.lane.b32.xlu0 %v2313, 16
        %v2387 = vpop.permute.xlu0 %2386
        %2390 = vrot.lane.b32.xlu0 %v2296, 32
        %v2391 = vpop.permute.xlu0 %2390
        %2394 = vrot.lane.b32.xlu0 %v2314, 48
        %v2395 = vpop.permute.xlu0 %2394
        %2398 = vrot.lane.b32.xlu0 %v2305, 64
        %v2399 = vpop.permute.xlu0 %2398
        %2402 = vrot.lane.b32.xlu0 %v2315, 80
        %v2403 = vpop.permute.xlu0 %2402
        %2406 = vrot.lane.b32.xlu0 %v2312, 96
        %v2407 = vpop.permute.xlu0 %2406
        %2410 = vrot.lane.b32.xlu0 %v2316, 112
        %v2411 = vpop.permute.xlu0 %2410
        %2414 = vrot.lane.b32.xlu0 %v2381, 16
        %v2415 = vpop.permute.xlu0 %2414
        %2418 = vrot.lane.b32.xlu0 %v2364, 32
        %v2419 = vpop.permute.xlu0 %2418
        %2422 = vrot.lane.b32.xlu0 %v2382, 48
        %v2423 = vpop.permute.xlu0 %2422
        %2426 = vrot.lane.b32.xlu0 %v2373, 64
        %v2427 = vpop.permute.xlu0 %2426
        %2430 = vrot.lane.b32.xlu0 %v2383, 80
        %v2431 = vpop.permute.xlu0 %2430
        %2434 = vrot.lane.b32.xlu0 %v2380, 96
        %v2435 = vpop.permute.xlu0 %2434
        %2438 = vrot.lane.b32.xlu0 %v2384, 112
        %v2439 = vpop.permute.xlu0 %2438
        %v2441 = vsel %vm481, %v2289, %v2387
        %v2442 = vsel %vm483, %v2441, %v2391
        %v2443 = vsel %vm485, %v2442, %v2395
        %v2444 = vsel %vm487, %v2443, %v2399
        %v2445 = vsel %vm489, %v2444, %v2403
        %v2446 = vsel %vm491, %v2445, %v2407
        %v2447 = vsel %vm493, %v2446, %v2411
        %v2448 = vsel %vm481, %v2357, %v2415
        %v2449 = vsel %vm483, %v2448, %v2419
        %v2450 = vsel %vm485, %v2449, %v2423
        %v2451 = vsel %vm487, %v2450, %v2427
        %v2452 = vsel %vm489, %v2451, %v2431
        %v2453 = vsel %vm491, %v2452, %v2435
        %v2454 = vsel %vm493, %v2453, %v2439
        %v2455 = vpack.c.bf16 %v2447, %v2447
        %v2456 = vpack.c.bf16 %v2454, %v2454
        %s2457 = scalar_lea.vmem %s1, 96
        %v2458 = vld [vmem:[%s2457] sm:$0xf]
        %v2459 = vld [vmem:[%s2457 + $0x4] sm:$0xf]
        %v2460 = vld [vmem:[%s2457 + $0x8] sm:$0xf]
        %v2461 = vld [vmem:[%s2457 + $0xc] sm:$0xf]
        %v2466 = vunpack.c.l.b16 %v2458
        %v2467 = vunpack.c.l.b16 %v2459
        %v2468 = vunpack.c.l.b16 %v2460
        %v2469 = vunpack.c.l.b16 %v2461
        %v2470 = vpack.c.b16 %v2467, %v2466
        %v2471 = vpack.c.b16 %v2469, %v2468
        %v2473 = vsel %vm518, %v2470, 0
        %v2476 = vsel %vm518, %v2471, 0
        %v2479 = vsel %vm525, %v2455, 0
        %v2482 = vsel %vm525, %v2456, 0
        %2484 = vmatprep.subr.bf16.mxu0 %v2482
        %2485 = vmatpush1.bf16.msra.mxu0 %v2479
        %2486 = vmatprep.subr.bf16.mxu0 0
        %2487 = vmatpush1.bf16.msra.mxu0 0
        %2488 = vmatprep.subr.bf16.mxu0 0
        %2489 = vmatpush1.bf16.msra.mxu0 0
        %2490 = vmatprep.subr.bf16.mxu0 0
        %2491 = vmatpush1.bf16.msra.mxu0 0
        %2492 = vmatprep.subr.bf16.mxu0 0
        %2493 = vmatpush1.bf16.msra.mxu0 0
        %2494 = vmatprep.subr.bf16.mxu0 0
        %2495 = vmatpush1.bf16.msra.mxu0 0
        %2496 = vmatprep.subr.bf16.mxu0 0
        %2497 = vmatpush1.bf16.msra.mxu0 0
        %2498 = vmatprep.subr.bf16.mxu0 0
        %2499 = vmatpush1.bf16.msra.mxu0 0
        %2500 = vmatprep.subr.bf16.mxu0 0
        %2501 = vmatpush1.bf16.msra.mxu0 0
        %2502 = vmatprep.subr.bf16.mxu0 0
        %2503 = vmatpush1.bf16.msra.mxu0 0
        %2504 = vmatprep.subr.bf16.mxu0 0
        %2505 = vmatpush1.bf16.msra.mxu0 0
        %2506 = vmatprep.subr.bf16.mxu0 0
        %2507 = vmatpush1.bf16.msra.mxu0 0
        %2508 = vmatprep.subr.bf16.mxu0 0
        %2509 = vmatpush1.bf16.msra.mxu0 0
        %2510 = vmatprep.subr.bf16.mxu0 0
        %2511 = vmatpush1.bf16.msra.mxu0 0
        %2512 = vmatprep.subr.bf16.mxu0 0
        %2513 = vmatpush1.bf16.msra.mxu0 0
        %2514 = vmatprep.subr.bf16.mxu0 0
        %2515 = vmatpush1.bf16.msra.mxu0 0
        %2516 = vmatprep.mubr.bf16.mxu0 0
        %2517 = vmatmul.mubr.bf16.gmra.mrb[0].mxu0 %v2473
        %v2518 = vpop.f32.mrb[0].mxu0
        %v2519 = vadd.f32 0.0, %v2518
        %v2520 = vpop.f32.mrb[0].mxu0
        %v2521 = vadd.f32 0.0, %v2520
        %v2522 = vpop.f32.mrb[0].mxu0
        %v2523 = vadd.f32 0.0, %v2522
        %v2524 = vpop.f32.mrb[0].mxu0
        %v2525 = vadd.f32 0.0, %v2524
        %2526 = vmatprep.mubr.bf16.mxu0 0
        %2527 = vmatmul.mubr.bf16.gmra.mrb[0].mxu0 %v2476
        %v2528 = vpop.f32.mrb[0].mxu0
        %v2529 = vadd.f32 0.0, %v2528
        %v2530 = vpop.f32.mrb[0].mxu0
        %v2531 = vadd.f32 0.0, %v2530
        %v2532 = vpop.f32.mrb[0].mxu0
        %v2533 = vadd.f32 0.0, %v2532
        %v2534 = vpop.f32.mrb[0].mxu0
        %v2535 = vadd.f32 0.0, %v2534
        %2536 = vdwg.mxu0
        %v2537 = vadd.f32 %v2233, %v2519
        %v2538 = vadd.f32 %v2234, %v2521
        %v2539 = vadd.f32 %v2235, %v2523
        %v2540 = vadd.f32 %v2236, %v2525
        %v2541 = vadd.f32 %v2237, %v2529
        %v2542 = vadd.f32 %v2238, %v2531
        %v2543 = vadd.f32 %v2239, %v2533
        %v2544 = vadd.f32 %v2240, %v2535
        %v2545 = vld [vmem:[#allocation2 + $0x2] sm:$0xff]
        %v2546 = vld [vmem:[#allocation2 + $0xa] sm:$0xff]
        %v2547 = vld [vmem:[#allocation2 + $0x1a] sm:$0xff]
        %v2548 = vld [vmem:[#allocation2 + $0x22] sm:$0xff]
        %v2549 = vld [vmem:[#allocation2 + $0x32] sm:$0xff]
        %v2550 = vld [vmem:[#allocation2 + $0x3a] sm:$0xff]
        %v2551 = vld [vmem:[#allocation2 + $0x4a] sm:$0xff]
        %v2552 = vld [vmem:[#allocation2 + $0x52] sm:$0xff]
        %2561 = vrot.lane.b32.xlu0 %v2545, 127
        %v2562 = vpop.permute.xlu0 %2561
        %2563 = vrot.lane.b32.xlu0 %v2546, 127
        %v2564 = vpop.permute.xlu0 %2563
        %2565 = vrot.lane.b32.xlu0 %v2547, 127
        %v2566 = vpop.permute.xlu0 %2565
        %2567 = vrot.lane.b32.xlu0 %v2548, 127
        %v2568 = vpop.permute.xlu0 %2567
        %2569 = vrot.lane.b32.xlu0 %v2549, 127
        %v2570 = vpop.permute.xlu0 %2569
        %2571 = vrot.lane.b32.xlu0 %v2550, 127
        %v2572 = vpop.permute.xlu0 %2571
        %2573 = vrot.lane.b32.xlu0 %v2551, 127
        %v2574 = vpop.permute.xlu0 %2573
        %2575 = vrot.lane.b32.xlu0 %v2552, 127
        %v2576 = vpop.permute.xlu0 %2575
        %v2585 = vcombine.low %v2562, %v2570
        %v2586 = vcombine.high %v2562, %v2570
        %v2588 = vunpack.c.l.s4 1983009808
        %v2589 = vunpack.c.0.s8 %v2588
        %v2590 = vlaneseq
        %v2591 = vshrl.u32 %v2590, 7
        %v2592 = vsub.s32 %v2589, %v2591
        %v2593 = vrot.slane %v2585, %v2592
        %v2595 = vunpack.c.l.s4 1983009808
        %v2596 = vunpack.c.0.s8 %v2595
        %v2597 = vlaneseq
        %v2598 = vshrl.u32 %v2597, 7
        %v2599 = vsub.s32 %v2596, %v2598
        %v2600 = vrot.slane %v2586, %v2599
        %v2601 = vcombine.low %v2566, %v2574
        %v2602 = vcombine.high %v2566, %v2574
        %v2604 = vunpack.c.l.s4 1983009808
        %v2605 = vunpack.c.0.s8 %v2604
        %v2606 = vlaneseq
        %v2607 = vshrl.u32 %v2606, 7
        %v2608 = vsub.s32 %v2605, %v2607
        %v2609 = vrot.slane %v2601, %v2608
        %v2611 = vunpack.c.l.s4 1983009808
        %v2612 = vunpack.c.0.s8 %v2611
        %v2613 = vlaneseq
        %v2614 = vshrl.u32 %v2613, 7
        %v2615 = vsub.s32 %v2612, %v2614
        %v2616 = vrot.slane %v2602, %v2615
        %v2617 = vcombine.low %v2593, %v2609
        %v2618 = vcombine.high %v2593, %v2609
        %v2620 = vunpack.c.l.s4 1934713408
        %v2621 = vunpack.c.0.s8 %v2620
        %v2622 = vlaneseq
        %v2623 = vshrl.u32 %v2622, 7
        %v2624 = vsub.s32 %v2621, %v2623
        %v2625 = vrot.slane %v2617, %v2624
        %v2627 = vunpack.c.l.s4 1934713408
        %v2628 = vunpack.c.0.s8 %v2627
        %v2629 = vlaneseq
        %v2630 = vshrl.u32 %v2629, 7
        %v2631 = vsub.s32 %v2628, %v2630
        %v2632 = vrot.slane %v2618, %v2631
        %v2633 = vcombine.low %v2600, %v2616
        %v2634 = vcombine.high %v2600, %v2616
        %v2636 = vunpack.c.l.s4 1934713408
        %v2637 = vunpack.c.0.s8 %v2636
        %v2638 = vlaneseq
        %v2639 = vshrl.u32 %v2638, 7
        %v2640 = vsub.s32 %v2637, %v2639
        %v2641 = vrot.slane %v2633, %v2640
        %v2643 = vunpack.c.l.s4 1934713408
        %v2644 = vunpack.c.0.s8 %v2643
        %v2645 = vlaneseq
        %v2646 = vshrl.u32 %v2645, 7
        %v2647 = vsub.s32 %v2644, %v2646
        %v2648 = vrot.slane %v2634, %v2647
        %v2649 = vcombine.high %v2625, 0.0
        %v2650 = vcombine.high %v2632, 0.0
        %v2651 = vcombine.high %v2641, 0.0
        %v2652 = vcombine.high %v2648, 0.0
        %v2653 = vcombine.low %v2564, %v2572
        %v2654 = vcombine.high %v2564, %v2572
        %v2656 = vunpack.c.l.s4 1983009808
        %v2657 = vunpack.c.0.s8 %v2656
        %v2658 = vlaneseq
        %v2659 = vshrl.u32 %v2658, 7
        %v2660 = vsub.s32 %v2657, %v2659
        %v2661 = vrot.slane %v2653, %v2660
        %v2663 = vunpack.c.l.s4 1983009808
        %v2664 = vunpack.c.0.s8 %v2663
        %v2665 = vlaneseq
        %v2666 = vshrl.u32 %v2665, 7
        %v2667 = vsub.s32 %v2664, %v2666
        %v2668 = vrot.slane %v2654, %v2667
        %v2669 = vcombine.low %v2568, %v2576
        %v2670 = vcombine.high %v2568, %v2576
        %v2672 = vunpack.c.l.s4 1983009808
        %v2673 = vunpack.c.0.s8 %v2672
        %v2674 = vlaneseq
        %v2675 = vshrl.u32 %v2674, 7
        %v2676 = vsub.s32 %v2673, %v2675
        %v2677 = vrot.slane %v2669, %v2676
        %v2679 = vunpack.c.l.s4 1983009808
        %v2680 = vunpack.c.0.s8 %v2679
        %v2681 = vlaneseq
        %v2682 = vshrl.u32 %v2681, 7
        %v2683 = vsub.s32 %v2680, %v2682
        %v2684 = vrot.slane %v2670, %v2683
        %v2685 = vcombine.low %v2661, %v2677
        %v2686 = vcombine.high %v2661, %v2677
        %v2688 = vunpack.c.l.s4 1934713408
        %v2689 = vunpack.c.0.s8 %v2688
        %v2690 = vlaneseq
        %v2691 = vshrl.u32 %v2690, 7
        %v2692 = vsub.s32 %v2689, %v2691
        %v2693 = vrot.slane %v2685, %v2692
        %v2695 = vunpack.c.l.s4 1934713408
        %v2696 = vunpack.c.0.s8 %v2695
        %v2697 = vlaneseq
        %v2698 = vshrl.u32 %v2697, 7
        %v2699 = vsub.s32 %v2696, %v2698
        %v2700 = vrot.slane %v2686, %v2699
        %v2701 = vcombine.low %v2668, %v2684
        %v2702 = vcombine.high %v2668, %v2684
        %v2704 = vunpack.c.l.s4 1934713408
        %v2705 = vunpack.c.0.s8 %v2704
        %v2706 = vlaneseq
        %v2707 = vshrl.u32 %v2706, 7
        %v2708 = vsub.s32 %v2705, %v2707
        %v2709 = vrot.slane %v2701, %v2708
        %v2711 = vunpack.c.l.s4 1934713408
        %v2712 = vunpack.c.0.s8 %v2711
        %v2713 = vlaneseq
        %v2714 = vshrl.u32 %v2713, 7
        %v2715 = vsub.s32 %v2712, %v2714
        %v2716 = vrot.slane %v2702, %v2715
        %v2717 = vcombine.high %v2693, 0.0
        %v2718 = vcombine.high %v2700, 0.0
        %v2719 = vcombine.high %v2709, 0.0
        %v2720 = vcombine.high %v2716, 0.0
        %2722 = vrot.lane.b32.xlu0 %v2649, 16
        %v2723 = vpop.permute.xlu0 %2722
        %2726 = vrot.lane.b32.xlu0 %v2632, 32
        %v2727 = vpop.permute.xlu0 %2726
        %2730 = vrot.lane.b32.xlu0 %v2650, 48
        %v2731 = vpop.permute.xlu0 %2730
        %2734 = vrot.lane.b32.xlu0 %v2641, 64
        %v2735 = vpop.permute.xlu0 %2734
        %2738 = vrot.lane.b32.xlu0 %v2651, 80
        %v2739 = vpop.permute.xlu0 %2738
        %2742 = vrot.lane.b32.xlu0 %v2648, 96
        %v2743 = vpop.permute.xlu0 %2742
        %2746 = vrot.lane.b32.xlu0 %v2652, 112
        %v2747 = vpop.permute.xlu0 %2746
        %2750 = vrot.lane.b32.xlu0 %v2717, 16
        %v2751 = vpop.permute.xlu0 %2750
        %2754 = vrot.lane.b32.xlu0 %v2700, 32
        %v2755 = vpop.permute.xlu0 %2754
        %2758 = vrot.lane.b32.xlu0 %v2718, 48
        %v2759 = vpop.permute.xlu0 %2758
        %2762 = vrot.lane.b32.xlu0 %v2709, 64
        %v2763 = vpop.permute.xlu0 %2762
        %2766 = vrot.lane.b32.xlu0 %v2719, 80
        %v2767 = vpop.permute.xlu0 %2766
        %2770 = vrot.lane.b32.xlu0 %v2716, 96
        %v2771 = vpop.permute.xlu0 %2770
        %2774 = vrot.lane.b32.xlu0 %v2720, 112
        %v2775 = vpop.permute.xlu0 %2774
        %v2777 = vsel %vm481, %v2625, %v2723
        %v2778 = vsel %vm483, %v2777, %v2727
        %v2779 = vsel %vm485, %v2778, %v2731
        %v2780 = vsel %vm487, %v2779, %v2735
        %v2781 = vsel %vm489, %v2780, %v2739
        %v2782 = vsel %vm491, %v2781, %v2743
        %v2783 = vsel %vm493, %v2782, %v2747
        %v2784 = vsel %vm481, %v2693, %v2751
        %v2785 = vsel %vm483, %v2784, %v2755
        %v2786 = vsel %vm485, %v2785, %v2759
        %v2787 = vsel %vm487, %v2786, %v2763
        %v2788 = vsel %vm489, %v2787, %v2767
        %v2789 = vsel %vm491, %v2788, %v2771
        %v2790 = vsel %vm493, %v2789, %v2775
        %v2791 = vpack.c.bf16 %v2783, %v2783
        %v2792 = vpack.c.bf16 %v2790, %v2790
        %s2793 = scalar_lea.vmem %s1, 112
        %v2794 = vld [vmem:[%s2793] sm:$0xf]
        %v2795 = vld [vmem:[%s2793 + $0x4] sm:$0xf]
        %v2796 = vld [vmem:[%s2793 + $0x8] sm:$0xf]
        %v2797 = vld [vmem:[%s2793 + $0xc] sm:$0xf]
        %v2802 = vunpack.c.l.b16 %v2794
        %v2803 = vunpack.c.l.b16 %v2795
        %v2804 = vunpack.c.l.b16 %v2796
        %v2805 = vunpack.c.l.b16 %v2797
        %v2806 = vpack.c.b16 %v2803, %v2802
        %v2807 = vpack.c.b16 %v2805, %v2804
        %v2809 = vsel %vm518, %v2806, 0
        %v2812 = vsel %vm518, %v2807, 0
        %v2815 = vsel %vm525, %v2791, 0
        %v2818 = vsel %vm525, %v2792, 0
        %2820 = vmatprep.subr.bf16.mxu0 %v2818
        %2821 = vmatpush1.bf16.msra.mxu0 %v2815
        %2822 = vmatprep.subr.bf16.mxu0 0
        %2823 = vmatpush1.bf16.msra.mxu0 0
        %2824 = vmatprep.subr.bf16.mxu0 0
        %2825 = vmatpush1.bf16.msra.mxu0 0
        %2826 = vmatprep.subr.bf16.mxu0 0
        %2827 = vmatpush1.bf16.msra.mxu0 0
        %2828 = vmatprep.subr.bf16.mxu0 0
        %2829 = vmatpush1.bf16.msra.mxu0 0
        %2830 = vmatprep.subr.bf16.mxu0 0
        %2831 = vmatpush1.bf16.msra.mxu0 0
        %2832 = vmatprep.subr.bf16.mxu0 0
        %2833 = vmatpush1.bf16.msra.mxu0 0
        %2834 = vmatprep.subr.bf16.mxu0 0
        %2835 = vmatpush1.bf16.msra.mxu0 0
        %2836 = vmatprep.subr.bf16.mxu0 0
        %2837 = vmatpush1.bf16.msra.mxu0 0
        %2838 = vmatprep.subr.bf16.mxu0 0
        %2839 = vmatpush1.bf16.msra.mxu0 0
        %2840 = vmatprep.subr.bf16.mxu0 0
        %2841 = vmatpush1.bf16.msra.mxu0 0
        %2842 = vmatprep.subr.bf16.mxu0 0
        %2843 = vmatpush1.bf16.msra.mxu0 0
        %2844 = vmatprep.subr.bf16.mxu0 0
        %2845 = vmatpush1.bf16.msra.mxu0 0
        %2846 = vmatprep.subr.bf16.mxu0 0
        %2847 = vmatpush1.bf16.msra.mxu0 0
        %2848 = vmatprep.subr.bf16.mxu0 0
        %2849 = vmatpush1.bf16.msra.mxu0 0
        %2850 = vmatprep.subr.bf16.mxu0 0
        %2851 = vmatpush1.bf16.msra.mxu0 0
        %2852 = vmatprep.mubr.bf16.mxu0 0
        %2853 = vmatmul.mubr.bf16.gmra.mrb[0].mxu0 %v2809
        %v2854 = vpop.f32.mrb[0].mxu0
        %v2855 = vadd.f32 0.0, %v2854
        %v2856 = vpop.f32.mrb[0].mxu0
        %v2857 = vadd.f32 0.0, %v2856
        %v2858 = vpop.f32.mrb[0].mxu0
        %v2859 = vadd.f32 0.0, %v2858
        %v2860 = vpop.f32.mrb[0].mxu0
        %v2861 = vadd.f32 0.0, %v2860
        %2862 = vmatprep.mubr.bf16.mxu0 0
        %2863 = vmatmul.mubr.bf16.gmra.mrb[0].mxu0 %v2812
        %v2864 = vpop.f32.mrb[0].mxu0
        %v2865 = vadd.f32 0.0, %v2864
        %v2866 = vpop.f32.mrb[0].mxu0
        %v2867 = vadd.f32 0.0, %v2866
        %v2868 = vpop.f32.mrb[0].mxu0
        %v2869 = vadd.f32 0.0, %v2868
        %v2870 = vpop.f32.mrb[0].mxu0
        %v2871 = vadd.f32 0.0, %v2870
        %2872 = vdwg.mxu0
        %v2873 = vadd.f32 %v2537, %v2855
        %v2874 = vadd.f32 %v2538, %v2857
        %v2875 = vadd.f32 %v2539, %v2859
        %v2876 = vadd.f32 %v2540, %v2861
        %v2877 = vadd.f32 %v2541, %v2865
        %v2878 = vadd.f32 %v2542, %v2867
        %v2879 = vadd.f32 %v2543, %v2869
        %v2880 = vadd.f32 %v2544, %v2871
        %v2881 = vld [vmem:[#allocation2 + $0x2] sm:$0xff]
        %v2882 = vld [vmem:[#allocation2 + $0xa] sm:$0xff]
        %v2883 = vld [vmem:[#allocation2 + $0x1a] sm:$0xff]
        %v2884 = vld [vmem:[#allocation2 + $0x22] sm:$0xff]
        %v2885 = vld [vmem:[#allocation2 + $0x32] sm:$0xff]
        %v2886 = vld [vmem:[#allocation2 + $0x3a] sm:$0xff]
        %v2887 = vld [vmem:[#allocation2 + $0x4a] sm:$0xff]
        %v2888 = vld [vmem:[#allocation2 + $0x52] sm:$0xff]
        %2897 = vrot.lane.b32.xlu0 %v2881, 126
        %v2898 = vpop.permute.xlu0 %2897
        %2899 = vrot.lane.b32.xlu0 %v2882, 126
        %v2900 = vpop.permute.xlu0 %2899
        %2901 = vrot.lane.b32.xlu0 %v2883, 126
        %v2902 = vpop.permute.xlu0 %2901
        %2903 = vrot.lane.b32.xlu0 %v2884, 126
        %v2904 = vpop.permute.xlu0 %2903
        %2905 = vrot.lane.b32.xlu0 %v2885, 126
        %v2906 = vpop.permute.xlu0 %2905
        %2907 = vrot.lane.b32.xlu0 %v2886, 126
        %v2908 = vpop.permute.xlu0 %2907
        %2909 = vrot.lane.b32.xlu0 %v2887, 126
        %v2910 = vpop.permute.xlu0 %2909
        %2911 = vrot.lane.b32.xlu0 %v2888, 126
        %v2912 = vpop.permute.xlu0 %2911
        %v2921 = vcombine.low %v2898, %v2906
        %v2922 = vcombine.high %v2898, %v2906
        %v2924 = vunpack.c.l.s4 1983009808
        %v2925 = vunpack.c.0.s8 %v2924
        %v2926 = vlaneseq
        %v2927 = vshrl.u32 %v2926, 7
        %v2928 = vsub.s32 %v2925, %v2927
        %v2929 = vrot.slane %v2921, %v2928
        %v2931 = vunpack.c.l.s4 1983009808
        %v2932 = vunpack.c.0.s8 %v2931
        %v2933 = vlaneseq
        %v2934 = vshrl.u32 %v2933, 7
        %v2935 = vsub.s32 %v2932, %v2934
        %v2936 = vrot.slane %v2922, %v2935
        %v2937 = vcombine.low %v2902, %v2910
        %v2938 = vcombine.high %v2902, %v2910
        %v2940 = vunpack.c.l.s4 1983009808
        %v2941 = vunpack.c.0.s8 %v2940
        %v2942 = vlaneseq
        %v2943 = vshrl.u32 %v2942, 7
        %v2944 = vsub.s32 %v2941, %v2943
        %v2945 = vrot.slane %v2937, %v2944
        %v2947 = vunpack.c.l.s4 1983009808
        %v2948 = vunpack.c.0.s8 %v2947
        %v2949 = vlaneseq
        %v2950 = vshrl.u32 %v2949, 7
        %v2951 = vsub.s32 %v2948, %v2950
        %v2952 = vrot.slane %v2938, %v2951
        %v2953 = vcombine.low %v2929, %v2945
        %v2954 = vcombine.high %v2929, %v2945
        %v2956 = vunpack.c.l.s4 1934713408
        %v2957 = vunpack.c.0.s8 %v2956
        %v2958 = vlaneseq
        %v2959 = vshrl.u32 %v2958, 7
        %v2960 = vsub.s32 %v2957, %v2959
        %v2961 = vrot.slane %v2953, %v2960
        %v2963 = vunpack.c.l.s4 1934713408
        %v2964 = vunpack.c.0.s8 %v2963
        %v2965 = vlaneseq
        %v2966 = vshrl.u32 %v2965, 7
        %v2967 = vsub.s32 %v2964, %v2966
        %v2968 = vrot.slane %v2954, %v2967
        %v2969 = vcombine.low %v2936, %v2952
        %v2970 = vcombine.high %v2936, %v2952
        %v2972 = vunpack.c.l.s4 1934713408
        %v2973 = vunpack.c.0.s8 %v2972
        %v2974 = vlaneseq
        %v2975 = vshrl.u32 %v2974, 7
        %v2976 = vsub.s32 %v2973, %v2975
        %v2977 = vrot.slane %v2969, %v2976
        %v2979 = vunpack.c.l.s4 1934713408
        %v2980 = vunpack.c.0.s8 %v2979
        %v2981 = vlaneseq
        %v2982 = vshrl.u32 %v2981, 7
        %v2983 = vsub.s32 %v2980, %v2982
        %v2984 = vrot.slane %v2970, %v2983
        %v2985 = vcombine.high %v2961, 0.0
        %v2986 = vcombine.high %v2968, 0.0
        %v2987 = vcombine.high %v2977, 0.0
        %v2988 = vcombine.high %v2984, 0.0
        %v2989 = vcombine.low %v2900, %v2908
        %v2990 = vcombine.high %v2900, %v2908
        %v2992 = vunpack.c.l.s4 1983009808
        %v2993 = vunpack.c.0.s8 %v2992
        %v2994 = vlaneseq
        %v2995 = vshrl.u32 %v2994, 7
        %v2996 = vsub.s32 %v2993, %v2995
        %v2997 = vrot.slane %v2989, %v2996
        %v2999 = vunpack.c.l.s4 1983009808
        %v3000 = vunpack.c.0.s8 %v2999
        %v3001 = vlaneseq
        %v3002 = vshrl.u32 %v3001, 7
        %v3003 = vsub.s32 %v3000, %v3002
        %v3004 = vrot.slane %v2990, %v3003
        %v3005 = vcombine.low %v2904, %v2912
        %v3006 = vcombine.high %v2904, %v2912
        %v3008 = vunpack.c.l.s4 1983009808
        %v3009 = vunpack.c.0.s8 %v3008
        %v3010 = vlaneseq
        %v3011 = vshrl.u32 %v3010, 7
        %v3012 = vsub.s32 %v3009, %v3011
        %v3013 = vrot.slane %v3005, %v3012
        %v3015 = vunpack.c.l.s4 1983009808
        %v3016 = vunpack.c.0.s8 %v3015
        %v3017 = vlaneseq
        %v3018 = vshrl.u32 %v3017, 7
        %v3019 = vsub.s32 %v3016, %v3018
        %v3020 = vrot.slane %v3006, %v3019
        %v3021 = vcombine.low %v2997, %v3013
        %v3022 = vcombine.high %v2997, %v3013
        %v3024 = vunpack.c.l.s4 1934713408
        %v3025 = vunpack.c.0.s8 %v3024
        %v3026 = vlaneseq
        %v3027 = vshrl.u32 %v3026, 7
        %v3028 = vsub.s32 %v3025, %v3027
        %v3029 = vrot.slane %v3021, %v3028
        %v3031 = vunpack.c.l.s4 1934713408
        %v3032 = vunpack.c.0.s8 %v3031
        %v3033 = vlaneseq
        %v3034 = vshrl.u32 %v3033, 7
        %v3035 = vsub.s32 %v3032, %v3034
        %v3036 = vrot.slane %v3022, %v3035
        %v3037 = vcombine.low %v3004, %v3020
        %v3038 = vcombine.high %v3004, %v3020
        %v3040 = vunpack.c.l.s4 1934713408
        %v3041 = vunpack.c.0.s8 %v3040
        %v3042 = vlaneseq
        %v3043 = vshrl.u32 %v3042, 7
        %v3044 = vsub.s32 %v3041, %v3043
        %v3045 = vrot.slane %v3037, %v3044
        %v3047 = vunpack.c.l.s4 1934713408
        %v3048 = vunpack.c.0.s8 %v3047
        %v3049 = vlaneseq
        %v3050 = vshrl.u32 %v3049, 7
        %v3051 = vsub.s32 %v3048, %v3050
        %v3052 = vrot.slane %v3038, %v3051
        %v3053 = vcombine.high %v3029, 0.0
        %v3054 = vcombine.high %v3036, 0.0
        %v3055 = vcombine.high %v3045, 0.0
        %v3056 = vcombine.high %v3052, 0.0
        %3058 = vrot.lane.b32.xlu0 %v2985, 16
        %v3059 = vpop.permute.xlu0 %3058
        %3062 = vrot.lane.b32.xlu0 %v2968, 32
        %v3063 = vpop.permute.xlu0 %3062
        %3066 = vrot.lane.b32.xlu0 %v2986, 48
        %v3067 = vpop.permute.xlu0 %3066
        %3070 = vrot.lane.b32.xlu0 %v2977, 64
        %v3071 = vpop.permute.xlu0 %3070
        %3074 = vrot.lane.b32.xlu0 %v2987, 80
        %v3075 = vpop.permute.xlu0 %3074
        %3078 = vrot.lane.b32.xlu0 %v2984, 96
        %v3079 = vpop.permute.xlu0 %3078
        %3082 = vrot.lane.b32.xlu0 %v2988, 112
        %v3083 = vpop.permute.xlu0 %3082
        %3086 = vrot.lane.b32.xlu0 %v3053, 16
        %v3087 = vpop.permute.xlu0 %3086
        %3090 = vrot.lane.b32.xlu0 %v3036, 32
        %v3091 = vpop.permute.xlu0 %3090
        %3094 = vrot.lane.b32.xlu0 %v3054, 48
        %v3095 = vpop.permute.xlu0 %3094
        %3098 = vrot.lane.b32.xlu0 %v3045, 64
        %v3099 = vpop.permute.xlu0 %3098
        %3102 = vrot.lane.b32.xlu0 %v3055, 80
        %v3103 = vpop.permute.xlu0 %3102
        %3106 = vrot.lane.b32.xlu0 %v3052, 96
        %v3107 = vpop.permute.xlu0 %3106
        %3110 = vrot.lane.b32.xlu0 %v3056, 112
        %v3111 = vpop.permute.xlu0 %3110
        %v3113 = vsel %vm481, %v2961, %v3059
        %v3114 = vsel %vm483, %v3113, %v3063
        %v3115 = vsel %vm485, %v3114, %v3067
        %v3116 = vsel %vm487, %v3115, %v3071
        %v3117 = vsel %vm489, %v3116, %v3075
        %v3118 = vsel %vm491, %v3117, %v3079
        %v3119 = vsel %vm493, %v3118, %v3083
        %v3120 = vsel %vm481, %v3029, %v3087
        %v3121 = vsel %vm483, %v3120, %v3091
        %v3122 = vsel %vm485, %v3121, %v3095
        %v3123 = vsel %vm487, %v3122, %v3099
        %v3124 = vsel %vm489, %v3123, %v3103
        %v3125 = vsel %vm491, %v3124, %v3107
        %v3126 = vsel %vm493, %v3125, %v3111
        %v3127 = vpack.c.bf16 %v3119, %v3119
        %v3128 = vpack.c.bf16 %v3126, %v3126
        %s3129 = scalar_lea.vmem %s1, 128
        %v3130 = vld [vmem:[%s3129] sm:$0xf]
        %v3131 = vld [vmem:[%s3129 + $0x4] sm:$0xf]
        %v3132 = vld [vmem:[%s3129 + $0x8] sm:$0xf]
        %v3133 = vld [vmem:[%s3129 + $0xc] sm:$0xf]
        %v3138 = vunpack.c.l.b16 %v3130
        %v3139 = vunpack.c.l.b16 %v3131
        %v3140 = vunpack.c.l.b16 %v3132
        %v3141 = vunpack.c.l.b16 %v3133
        %v3142 = vpack.c.b16 %v3139, %v3138
        %v3143 = vpack.c.b16 %v3141, %v3140
        %v3145 = vsel %vm518, %v3142, 0
        %v3148 = vsel %vm518, %v3143, 0
        %v3151 = vsel %vm525, %v3127, 0
        %v3154 = vsel %vm525, %v3128, 0
        %3156 = vmatprep.subr.bf16.mxu0 %v3154
        %3157 = vmatpush1.bf16.msra.mxu0 %v3151
        %3158 = vmatprep.subr.bf16.mxu0 0
        %3159 = vmatpush1.bf16.msra.mxu0 0
        %3160 = vmatprep.subr.bf16.mxu0 0
        %3161 = vmatpush1.bf16.msra.mxu0 0
        %3162 = vmatprep.subr.bf16.mxu0 0
        %3163 = vmatpush1.bf16.msra.mxu0 0
        %3164 = vmatprep.subr.bf16.mxu0 0
        %3165 = vmatpush1.bf16.msra.mxu0 0
        %3166 = vmatprep.subr.bf16.mxu0 0
        %3167 = vmatpush1.bf16.msra.mxu0 0
        %3168 = vmatprep.subr.bf16.mxu0 0
        %3169 = vmatpush1.bf16.msra.mxu0 0
        %3170 = vmatprep.subr.bf16.mxu0 0
        %3171 = vmatpush1.bf16.msra.mxu0 0
        %3172 = vmatprep.subr.bf16.mxu0 0
        %3173 = vmatpush1.bf16.msra.mxu0 0
        %3174 = vmatprep.subr.bf16.mxu0 0
        %3175 = vmatpush1.bf16.msra.mxu0 0
        %3176 = vmatprep.subr.bf16.mxu0 0
        %3177 = vmatpush1.bf16.msra.mxu0 0
        %3178 = vmatprep.subr.bf16.mxu0 0
        %3179 = vmatpush1.bf16.msra.mxu0 0
        %3180 = vmatprep.subr.bf16.mxu0 0
        %3181 = vmatpush1.bf16.msra.mxu0 0
        %3182 = vmatprep.subr.bf16.mxu0 0
        %3183 = vmatpush1.bf16.msra.mxu0 0
        %3184 = vmatprep.subr.bf16.mxu0 0
        %3185 = vmatpush1.bf16.msra.mxu0 0
        %3186 = vmatprep.subr.bf16.mxu0 0
        %3187 = vmatpush1.bf16.msra.mxu0 0
        %3188 = vmatprep.mubr.bf16.mxu0 0
        %3189 = vmatmul.mubr.bf16.gmra.mrb[0].mxu0 %v3145
        %v3190 = vpop.f32.mrb[0].mxu0
        %v3191 = vadd.f32 0.0, %v3190
        %v3192 = vpop.f32.mrb[0].mxu0
        %v3193 = vadd.f32 0.0, %v3192
        %v3194 = vpop.f32.mrb[0].mxu0
        %v3195 = vadd.f32 0.0, %v3194
        %v3196 = vpop.f32.mrb[0].mxu0
        %v3197 = vadd.f32 0.0, %v3196
        %3198 = vmatprep.mubr.bf16.mxu0 0
        %3199 = vmatmul.mubr.bf16.gmra.mrb[0].mxu0 %v3148
        %v3200 = vpop.f32.mrb[0].mxu0
        %v3201 = vadd.f32 0.0, %v3200
        %v3202 = vpop.f32.mrb[0].mxu0
        %v3203 = vadd.f32 0.0, %v3202
        %v3204 = vpop.f32.mrb[0].mxu0
        %v3205 = vadd.f32 0.0, %v3204
        %v3206 = vpop.f32.mrb[0].mxu0
        %v3207 = vadd.f32 0.0, %v3206
        %3208 = vdwg.mxu0
        %v3209 = vadd.f32 %v2873, %v3191
        %v3210 = vadd.f32 %v2874, %v3193
        %v3211 = vadd.f32 %v2875, %v3195
        %v3212 = vadd.f32 %v2876, %v3197
        %v3213 = vadd.f32 %v2877, %v3201
        %v3214 = vadd.f32 %v2878, %v3203
        %v3215 = vadd.f32 %v2879, %v3205
        %v3216 = vadd.f32 %v2880, %v3207
        %3217 = vst [vmem:[%s163] sm:$0xff] %v3209
        %3218 = vst [vmem:[%s163 + $0x8] sm:$0xff] %v3210
        %3219 = vst [vmem:[%s163 + $0x10] sm:$0xff] %v3211
        %3220 = vst [vmem:[%s163 + $0x18] sm:$0xff] %v3212
        %3221 = vst [vmem:[%s163 + $0x20] sm:$0xff] %v3213
        %3222 = vst [vmem:[%s163 + $0x28] sm:$0xff] %v3214
        %3223 = vst [vmem:[%s163 + $0x30] sm:$0xff] %v3215
        %3224 = vst [vmem:[%s163 + $0x38] sm:$0xff] %v3216
        %s3225 = sand.u32 %s93, 1
        %s3226 = scalar_lea.sflag [#allocation4], %s3225
        %s3227 = sand.u32 %s93, 1
        %s3228 = smul.addr %s3227, 64
        %s3229 = scalar_lea.vmem [#allocation3], %s3228
        // Predicated region
        $region33: #{tpu_custom_call.1} parent=31 // pred_check
          %p3230 = pneg %p103
        $region34: #{tpu_custom_call.1} parent=31 // pred_check_branch
          %3232 = sbr.rel (%p3230) target = $region36
        $region35: #{tpu_custom_call.1} parent=31 // pred_region
          %s3234 = ssub.s32 1024, 1024
          %3235 = vsyncadd %s3226, %s3234
          %s3236 = smul.addr %s17, 8
          %s3237 = smul.addr %s3236, 128
          %s3238 = scalar_lea.hbm %s3, %s3237
          %s3239 = sshll.u32 %s3229, 4
          %s3240 = int_to_ptr.vmem [resolvable:$true] %s3239
          %3245 = dma.vmem_to_hbm [thread:$0]  %s3240, 1024, %s3238, %s3226, 256, 256, 16
        $region36: #{tpu_custom_call.1} parent=31 // pred_fallthru
          _
      $region32: #{tpu_custom_call.1} parent=5 // pred_fallthru
        _
      %p3246 = scmp.le.s32.totalorder 2, %s12
      // Predicated region
      $region37: #{tpu_custom_call.1} parent=5 // pred_check
        %p3247 = pneg %p3246
      $region38: #{tpu_custom_call.1} parent=5 // pred_check_branch
        %3249 = sbr.rel (%p3247) target = $region40
      $region39: #{tpu_custom_call.1} parent=5 // pred_region
        %s3250 = ssub.s32 %s12, 2
        // Predicated region
        $region41: #{tpu_custom_call.1} parent=39 // pred_check
          %p3251 = pneg %p109
        $region42: #{tpu_custom_call.1} parent=39 // pred_check_branch
          %3253 = sbr.rel (%p3251) target = $region44
        $region43: #{tpu_custom_call.1} parent=39 // pred_region
          %s3254 = sand.u32 %s94, 1
          %s3255 = scalar_lea.sflag [#allocation4], %s3254
          %s3256 = sand.u32 %s94, 1
          %s3257 = smul.addr %s3256, 64
          %s3258 = scalar_lea.vmem [#allocation3], %s3257
          %3259 = dma.done %s3255, 1024
        $region44: #{tpu_custom_call.1} parent=39 // pred_fallthru
          _
      $region40: #{tpu_custom_call.1} parent=5 // pred_fallthru
        _
    $region6: #{tpu_custom_call.1} parent=1 // loop_footer
      %s16 = sadd.s32 1, %s12
    $region7: #{tpu_custom_call.1} parent=1 // loop_footer_branch
      %11 = sbr.rel target = $region3
    $region8: #{tpu_custom_call.1} parent=1 // loop_exit
      _
    %3260 = vsyncpa [#allocation4], 1
    %s3261 = scalar_lea.sflag [#allocation4], 1
    %3262 = vsyncpa %s3261, 1

</llo_original>
